<compile_context>
chip_gen: v5e
topology: v5e:2x2
jax: 0.10.0
libtpu: 0.0.40
codegen_flags: <defaults>
</compile_context>

<pallas_src>
import functools
import math

import jax
import jax.numpy as jnp
from jax.experimental import pallas as pl
from jax.experimental.pallas import tpu as pltpu

LOG2_E = 1.4426950408889634


# ------------------------------ helpers ----------------------------------------

def _pick_tile(n, target):
    """Largest multiple-of-8 divisor of n that is <= target; else full dim."""
    if n <= target:
        return n
    for t in range(target - target % 8, 7, -8):
        if n % t == 0:
            return t
    return n  # full dimension is always a legal block size


def _pick_head_group(heads, dim_head):
    """Smallest divisor g of heads with g*dim_head lane-dense (128-multiple);
    falls back to all heads (block == full inner dim, always legal)."""
    for g in range(1, heads + 1):
        if heads % g == 0 and (g * dim_head) % 128 == 0:
            return g
    return heads


def _chip_defaults():
    """(row_tile, q_tile, kv_tile, vmem_limit_bytes) per TPU generation."""
    kind = ""
    try:
        kind = jax.devices()[0].device_kind.lower()
    except Exception:
        pass
    if "v7" in kind:
        # v7x: only 64 MiB VMEM per TensorCore; HBM is fast, keep tiles modest.
        return 256, 256, 256, 56 * 1024 * 1024
    if "v6" in kind or "v5" in kind:
        # 128 MiB VMEM: bigger tiles cut K/V re-streaming from HBM.
        return 512, 512, 512, 96 * 1024 * 1024
    return 256, 256, 256, None


def _compiler_params(dim_sem, vmem_limit):
    if vmem_limit is None:
        return pltpu.CompilerParams(dimension_semantics=dim_sem)
    return pltpu.CompilerParams(dimension_semantics=dim_sem,
                                vmem_limit_bytes=vmem_limit)


def _maybe_buffered(block_shape, index_map, depth):
    """BlockSpec with N-deep buffering when supported (hides K/V DMA latency)."""
    if depth > 2 and hasattr(pl, "Buffered"):
        try:
            return pl.BlockSpec(block_shape, index_map,
                                pipeline_mode=pl.Buffered(depth))
        except TypeError:
            pass
    return pl.BlockSpec(block_shape, index_map)


# ------------------------------- Pallas kernels ---------------------------------

def qkv_proj_kernel(x_ref, wq_ref, bq_ref, wk_ref, bk_ref, wv_ref, bv_ref,
                    q_ref, k_ref, v_ref):
    """Fused Q/K/V projection for one row tile (bf16 MXU, f32 accumulation)."""
    x = x_ref[...]                                   # (tm, D) bf16
    q_ref[...] = (jnp.dot(x, wq_ref[...], preferred_element_type=jnp.float32)
                  + bq_ref[...]).astype(q_ref.dtype)
    k_ref[...] = (jnp.dot(x, wk_ref[...], preferred_element_type=jnp.float32)
                  + bk_ref[...]).astype(k_ref.dtype)
    v_ref[...] = (jnp.dot(x, wv_ref[...], preferred_element_type=jnp.float32)
                  + bv_ref[...]).astype(v_ref.dtype)


def flash_attn_kernel(q_ref, k_ref, v_ref, o_ref, m_sc, l_sc, acc_sc,
                      *, dim_head, group, approx_recip):
    """Online-softmax attention for one (batch, head-group, q-tile) block.

    Blocks are (1, t, group*dim_head): heads are static lane slices inside the
    body, the HBM output store is lane-dense.  Scores are in the log2 domain
    (scale * log2(e) folded into the Q projection) so exp2 replaces exp.
    """
    ki = pl.program_id(3)

    @pl.when(ki == 0)
    def _init():
        m_sc[...] = jnp.full(m_sc.shape, -jnp.inf, dtype=m_sc.dtype)
        l_sc[...] = jnp.zeros(l_sc.shape, dtype=l_sc.dtype)
        acc_sc[...] = jnp.zeros(acc_sc.shape, dtype=acc_sc.dtype)

    q = q_ref[0]                                     # (tq, group*dh) bf16
    k = k_ref[0]                                     # (tk, group*dh) bf16
    v = v_ref[0]                                     # (tk, group*dh) bf16

    for h in range(group):                           # static unrolled head loop
        sl = slice(h * dim_head, (h + 1) * dim_head)
        s = jax.lax.dot_general(                     # (tq, tk) f32 on the MXU
            q[:, sl], k[:, sl], (((1,), (1,)), ((), ())),
            preferred_element_type=jnp.float32)

        m_prev = m_sc[h]                             # (tq, 1)
        m_new = jnp.maximum(m_prev, jnp.max(s, axis=-1, keepdims=True))
        alpha = jnp.exp2(m_prev - m_new)             # log2-domain online softmax
        p = jnp.exp2(s - m_new)                      # (tq, tk) f32
        l_sc[h] = alpha * l_sc[h] + jnp.sum(p, axis=-1, keepdims=True)
        acc_sc[h] = alpha * acc_sc[h] + jnp.dot(
            p.astype(v.dtype), v[:, sl], preferred_element_type=jnp.float32)
        m_sc[h] = m_new

    @pl.when(ki == pl.num_programs(3) - 1)
    def _finalize():
        outs = []
        for h in range(group):
            if approx_recip:
                outs.append(acc_sc[h] * pl.reciprocal(l_sc[h], approx=True))
            else:
                outs.append(acc_sc[h] / l_sc[h])
        o_ref[0] = jnp.concatenate(outs, axis=-1).astype(o_ref.dtype)


def out_proj_kernel(a_ref, wo_ref, bo_ref, o_ref):
    """Output projection to_out[0] for one row tile (Dropout = identity)."""
    o_ref[...] = (jnp.dot(a_ref[...], wo_ref[...],
                          preferred_element_type=jnp.float32)
                  + bo_ref[...]).astype(o_ref.dtype)


# ---------------------------------- wrapper -------------------------------------

def attention_forward(x, params, *, heads, dim_head,
                      row_tile=None, q_tile=None, kv_tile=None,
                      vmem_limit_bytes=None, approx_recip=True):
    B, N, D = x.shape
    inner = heads * dim_head
    M = B * N

    d_row, d_q, d_kv, d_vmem = _chip_defaults()
    row_tile = d_row if row_tile is None else row_tile
    q_tile = d_q if q_tile is None else q_tile
    kv_tile = d_kv if kv_tile is None else kv_tile
    vmem_limit = d_vmem if vmem_limit_bytes is None else vmem_limit_bytes

    # Fold both the 1/sqrt(dim_head) attention scale and log2(e) (exp2-based
    # softmax) into the Q projection on the host: zero extra kernel work.
    scale = LOG2_E / math.sqrt(dim_head)
    wq = (params["wq"] * scale).astype(jnp.bfloat16)
    bq = (params["bq"] * scale).astype(jnp.float32)
    wk = params["wk"].astype(jnp.bfloat16)
    bk = params["bk"].astype(jnp.float32)
    wv = params["wv"].astype(jnp.bfloat16)
    bv = params["bv"].astype(jnp.float32)
    wo = params["wo"].astype(jnp.bfloat16)
    bo = params["bo"].astype(jnp.float32)

    tm = _pick_tile(M, row_tile)
    tq = _pick_tile(N, q_tile)
    tk = _pick_tile(N, kv_tile)
    G = _pick_head_group(heads, dim_head)       # heads per grid step
    HG = heads // G
    gdh = G * dim_head

    # Stream x once as bf16 (halves kernel-1 input HBM traffic).
    x_bf = x.reshape(M, D).astype(jnp.bfloat16)

    full = lambda i: (0, 0)
    row_sem = _compiler_params(("parallel",), vmem_limit)

    # --- kernel 1: fused Q/K/V projection, row-tiled over B*N ---
    # TODO(synk): for very large D/inner (v7x 64 MiB VMEM) add a K-reduction
    # grid axis so the three weight matrices need not be fully VMEM-resident.
    q2d, k2d, v2d = pl.pallas_call(
        qkv_proj_kernel,
        out_shape=(jax.ShapeDtypeStruct((M, inner), jnp.bfloat16),) * 3,
        grid=(M // tm,),
        in_specs=[
            pl.BlockSpec((tm, D), lambda i: (i, 0)),
            pl.BlockSpec((D, inner), full), pl.BlockSpec((1, inner), full),
            pl.BlockSpec((D, inner), full), pl.BlockSpec((1, inner), full),
            pl.BlockSpec((D, inner), full), pl.BlockSpec((1, inner), full),
        ],
        out_specs=(pl.BlockSpec((tm, inner), lambda i: (i, 0)),) * 3,
        compiler_params=row_sem,
    )(x_bf, wq, bq, wk, bk, wv, bv)

    # Heads stay contiguous along the lane axis: reshape only, no transpose.
    qh = q2d.reshape(B, N, inner)
    kh = k2d.reshape(B, N, inner)
    vh = v2d.reshape(B, N, inner)

    kv_depth = 3 if (N // tk) >= 3 else 2
    kernel2 = functools.partial(flash_attn_kernel, dim_head=dim_head, group=G,
                                approx_recip=approx_recip)

    # --- kernel 2: flash attention; heads indexed via BlockSpec, G heads per
    # step so the output block is lane-dense; KV reduction axis streamed ---
    attn = pl.pallas_call(
        kernel2,
        out_shape=jax.ShapeDtypeStruct((B, N, inner), jnp.bfloat16),
        grid=(B, HG, N // tq, N // tk),
        in_specs=[
            pl.BlockSpec((1, tq, gdh), lambda b, hg, qi, ki: (b, qi, hg)),
            _maybe_buffered((1, tk, gdh),
                            lambda b, hg, qi, ki: (b, ki, hg), kv_depth),
            _maybe_buffered((1, tk, gdh),
                            lambda b, hg, qi, ki: (b, ki, hg), kv_depth),
        ],
        out_specs=pl.BlockSpec((1, tq, gdh), lambda b, hg, qi, ki: (b, qi, hg)),
        scratch_shapes=[
            pltpu.VMEM((G, tq, 1), jnp.float32),          # running max m
            pltpu.VMEM((G, tq, 1), jnp.float32),          # running denom l
            pltpu.VMEM((G, tq, dim_head), jnp.float32),   # output accumulator
        ],
        compiler_params=_compiler_params(
            ("parallel", "parallel", "parallel", "arbitrary"), vmem_limit),
    )(qh, kh, vh)

    # --- kernel 3: output projection (to_out[0]); to_out[1] Dropout = identity ---
    out2d = pl.pallas_call(
        out_proj_kernel,
        out_shape=jax.ShapeDtypeStruct((M, D), x.dtype),
        grid=(M // tm,),
        in_specs=[
            pl.BlockSpec((tm, inner), lambda i: (i, 0)),
            pl.BlockSpec((inner, D), full),
            pl.BlockSpec((1, D), full),
        ],
        out_specs=pl.BlockSpec((tm, D), lambda i: (i, 0)),
        compiler_params=row_sem,
    )(attn.reshape(M, inner), wo, bo)

    return out2d.reshape(B, N, D)


# ------------------------------ pure-JAX reference ------------------------------

def attention_reference(x, params, *, heads, dim_head):
    B, N, D = x.shape
    inner = heads * dim_head
    q = x @ params["wq"] + params["bq"][0]
    k = x @ params["wk"] + params["bk"][0]
    v = x @ params["wv"] + params["bv"][0]
    qh = q.reshape(B, N, heads, dim_head).transpose(0, 2, 1, 3)
    kh = k.reshape(B, N, heads, dim_head).transpose(0, 2, 1, 3)
    vh = v.reshape(B, N, heads, dim_head).transpose(0, 2, 1, 3)
    s = jnp.einsum("bhnd,bhmd->bhnm", qh, kh) / math.sqrt(dim_head)
    p = jax.nn.softmax(s, axis=-1)
    o = jnp.einsum("bhnm,bhmd->bhnd", p, vh)
    o = o.transpose(0, 2, 1, 3).reshape(B, N, inner)
    return o @ params["wo"] + params["bo"][0]


# ------------------------------------ main --------------------------------------

if __name__ == "__main__":
    B, N, D = 2, 64, 32
    heads, dim_head = 4, 8
    inner = heads * dim_head

    key = jax.random.PRNGKey(0)
    keys = jax.random.split(key, 9)

    def w(k, shape, scale=0.05):
        return jax.random.normal(k, shape, jnp.float32) * scale

    params = {
        "wq": w(keys[0], (D, inner)), "bq": w(keys[1], (1, inner)),
        "wk": w(keys[2], (D, inner)), "bk": w(keys[3], (1, inner)),
        "wv": w(keys[4], (D, inner)), "bv": w(keys[5], (1, inner)),
        "wo": w(keys[6], (inner, D)), "bo": w(keys[7], (1, D)),
    }
    x = jax.random.normal(keys[8], (B, N, D), jnp.float32)

    # Small tiles so the multi-tile online-softmax path is exercised.
    fwd = jax.jit(functools.partial(
        attention_forward, heads=heads, dim_head=dim_head,
        row_tile=64, q_tile=32, kv_tile=32))

    out = jax.block_until_ready(fwd(x, params))

    ref = attention_reference(x, params, heads=heads, dim_head=dim_head)
    assert out.shape == (B, N, D)
    err = float(jnp.max(jnp.abs(out - ref)))
    assert jnp.allclose(out, ref, atol=2e-2, rtol=2e-2), err

    print("KERNEL_OK")
</pallas_src>

<mosaic_0001>
module attributes {stable_mosaic.version = 11 : i64} {
  func.func @out_proj_kernel(%arg0: i32, %arg1: memref<64x32xbf16, #tpu.memory_space<vmem>>, %arg2: memref<32x32xbf16, #tpu.memory_space<vmem>>, %arg3: memref<1x32xf32, #tpu.memory_space<vmem>>, %arg4: memref<64x32xf32, #tpu.memory_space<vmem>>) attributes {dimension_semantics = [#tpu.dimension_semantics<parallel>], iteration_bounds = array<i64: 2>, scalar_prefetch = 0 : i64, scratch_operands = 0 : i64, tpu.core_type = #tpu.core_type<tc>, window_params = [{transform_indices = @transform_0, window_bounds = array<i64: 64, 32>}, {pipeline_mode = #tpu.pipeline_mode<synchronous>, transform_indices = @transform_1, window_bounds = array<i64: 32, 32>}, {pipeline_mode = #tpu.pipeline_mode<synchronous>, transform_indices = @transform_2, window_bounds = array<i64: 1, 32>}, {transform_indices = @transform_3, window_bounds = array<i64: 64, 32>}]} {
    %c0 = arith.constant 0 : index
    %c0_0 = arith.constant 0 : index
    %0 = vector.load %arg1[%c0, %c0_0] : memref<64x32xbf16, #tpu.memory_space<vmem>>, vector<64x32xbf16>
    %c0_1 = arith.constant 0 : index
    %c0_2 = arith.constant 0 : index
    %1 = vector.load %arg2[%c0_1, %c0_2] : memref<32x32xbf16, #tpu.memory_space<vmem>>, vector<32x32xbf16>
    %cst = arith.constant dense<0.000000e+00> : vector<64x32xf32>
    %2 = tpu.matmul %0, %1, %cst {dimension_numbers = #tpu.dot_dimension_numbers<[1], [0], [0], [1], [0, 0, 1, 1], [], []>} : vector<64x32xbf16>, vector<32x32xbf16>, vector<64x32xf32> -> vector<64x32xf32>
    %c0_3 = arith.constant 0 : index
    %c0_4 = arith.constant 0 : index
    %3 = vector.load %arg3[%c0_3, %c0_4] : memref<1x32xf32, #tpu.memory_space<vmem>>, vector<1x32xf32>
    %4 = vector.broadcast %3 : vector<1x32xf32> to vector<64x32xf32>
    %5 = arith.addf %2, %4 : vector<64x32xf32>
    %c0_5 = arith.constant 0 : index
    %c0_6 = arith.constant 0 : index
    %6 = vector.load %arg4[%c0_5, %c0_6] : memref<64x32xf32, #tpu.memory_space<vmem>>, vector<64x32xf32>
    tpu.vector_store %arg4[%c0_5, %c0_6], %5 {strides = array<i32>} : memref<64x32xf32, #tpu.memory_space<vmem>>, vector<64x32xf32>,
    return
  }
  func.func @transform_0(%arg0: i32) -> (i32, i32) {
    %c0_i32 = arith.constant 0 : i32
    %c0_i32_0 = arith.constant 0 : i32
    return %arg0, %c0_i32 : i32, i32
  }
  func.func @transform_1(%arg0: i32) -> (i32, i32) {
    %c0_i32 = arith.constant 0 : i32
    %c0_i32_0 = arith.constant 0 : i32
    %c0_i32_1 = arith.constant 0 : i32
    return %c0_i32, %c0_i32_0 : i32, i32
  }
  func.func @transform_2(%arg0: i32) -> (i32, i32) {
    %c0_i32 = arith.constant 0 : i32
    %c0_i32_0 = arith.constant 0 : i32
    %c0_i32_1 = arith.constant 0 : i32
    return %c0_i32, %c0_i32_0 : i32, i32
  }
  func.func @transform_3(%arg0: i32) -> (i32, i32) {
    %c0_i32 = arith.constant 0 : i32
    %c0_i32_0 = arith.constant 0 : i32
    return %arg0, %c0_i32 : i32, i32
  }
}

module attributes {stable_mosaic.version = 11 : i64} {
  func.func @qkv_proj_kernel(%arg0: i32, %arg1: memref<64x32xbf16, #tpu.memory_space<vmem>>, %arg2: memref<32x32xbf16, #tpu.memory_space<vmem>>, %arg3: memref<1x32xf32, #tpu.memory_space<vmem>>, %arg4: memref<32x32xbf16, #tpu.memory_space<vmem>>, %arg5: memref<1x32xf32, #tpu.memory_space<vmem>>, %arg6: memref<32x32xbf16, #tpu.memory_space<vmem>>, %arg7: memref<1x32xf32, #tpu.memory_space<vmem>>, %arg8: memref<64x32xbf16, #tpu.memory_space<vmem>>, %arg9: memref<64x32xbf16, #tpu.memory_space<vmem>>, %arg10: memref<64x32xbf16, #tpu.memory_space<vmem>>) attributes {dimension_semantics = [#tpu.dimension_semantics<parallel>], iteration_bounds = array<i64: 2>, scalar_prefetch = 0 : i64, scratch_operands = 0 : i64, tpu.core_type = #tpu.core_type<tc>, window_params = [{transform_indices = @transform_0, window_bounds = array<i64: 64, 32>}, {pipeline_mode = #tpu.pipeline_mode<synchronous>, transform_indices = @transform_1, window_bounds = array<i64: 32, 32>}, {pipeline_mode = #tpu.pipeline_mode<synchronous>, transform_indices = @transform_2, window_bounds = array<i64: 1, 32>}, {pipeline_mode = #tpu.pipeline_mode<synchronous>, transform_indices = @transform_3, window_bounds = array<i64: 32, 32>}, {pipeline_mode = #tpu.pipeline_mode<synchronous>, transform_indices = @transform_4, window_bounds = array<i64: 1, 32>}, {pipeline_mode = #tpu.pipeline_mode<synchronous>, transform_indices = @transform_5, window_bounds = array<i64: 32, 32>}, {pipeline_mode = #tpu.pipeline_mode<synchronous>, transform_indices = @transform_6, window_bounds = array<i64: 1, 32>}, {transform_indices = @transform_7, window_bounds = array<i64: 64, 32>}, {transform_indices = @transform_8, window_bounds = array<i64: 64, 32>}, {transform_indices = @transform_9, window_bounds = array<i64: 64, 32>}]} {
    %c0 = arith.constant 0 : index
    %c0_0 = arith.constant 0 : index
    %0 = vector.load %arg1[%c0, %c0_0] : memref<64x32xbf16, #tpu.memory_space<vmem>>, vector<64x32xbf16>
    %c0_1 = arith.constant 0 : index
    %c0_2 = arith.constant 0 : index
    %1 = vector.load %arg2[%c0_1, %c0_2] : memref<32x32xbf16, #tpu.memory_space<vmem>>, vector<32x32xbf16>
    %cst = arith.constant dense<0.000000e+00> : vector<64x32xf32>
    %2 = tpu.matmul %0, %1, %cst {dimension_numbers = #tpu.dot_dimension_numbers<[1], [0], [0], [1], [0, 0, 1, 1], [], []>} : vector<64x32xbf16>, vector<32x32xbf16>, vector<64x32xf32> -> vector<64x32xf32>
    %c0_3 = arith.constant 0 : index
    %c0_4 = arith.constant 0 : index
    %3 = vector.load %arg3[%c0_3, %c0_4] : memref<1x32xf32, #tpu.memory_space<vmem>>, vector<1x32xf32>
    %4 = vector.broadcast %3 : vector<1x32xf32> to vector<64x32xf32>
    %5 = arith.addf %2, %4 : vector<64x32xf32>
    %6 = arith.truncf %5 : vector<64x32xf32> to vector<64x32xbf16>
    %c0_5 = arith.constant 0 : index
    %c0_6 = arith.constant 0 : index
    %7 = vector.load %arg8[%c0_5, %c0_6] : memref<64x32xbf16, #tpu.memory_space<vmem>>, vector<64x32xbf16>
    tpu.vector_store %arg8[%c0_5, %c0_6], %6 {strides = array<i32>} : memref<64x32xbf16, #tpu.memory_space<vmem>>, vector<64x32xbf16>,
    %c0_7 = arith.constant 0 : index
    %c0_8 = arith.constant 0 : index
    %8 = vector.load %arg4[%c0_7, %c0_8] : memref<32x32xbf16, #tpu.memory_space<vmem>>, vector<32x32xbf16>
    %cst_9 = arith.constant dense<0.000000e+00> : vector<64x32xf32>
    %9 = tpu.matmul %0, %8, %cst_9 {dimension_numbers = #tpu.dot_dimension_numbers<[1], [0], [0], [1], [0, 0, 1, 1], [], []>} : vector<64x32xbf16>, vector<32x32xbf16>, vector<64x32xf32> -> vector<64x32xf32>
    %c0_10 = arith.constant 0 : index
    %c0_11 = arith.constant 0 : index
    %10 = vector.load %arg5[%c0_10, %c0_11] : memref<1x32xf32, #tpu.memory_space<vmem>>, vector<1x32xf32>
    %11 = vector.broadcast %10 : vector<1x32xf32> to vector<64x32xf32>
    %12 = arith.addf %9, %11 : vector<64x32xf32>
    %13 = arith.truncf %12 : vector<64x32xf32> to vector<64x32xbf16>
    %c0_12 = arith.constant 0 : index
    %c0_13 = arith.constant 0 : index
    %14 = vector.load %arg9[%c0_12, %c0_13] : memref<64x32xbf16, #tpu.memory_space<vmem>>, vector<64x32xbf16>
    tpu.vector_store %arg9[%c0_12, %c0_13], %13 {strides = array<i32>} : memref<64x32xbf16, #tpu.memory_space<vmem>>, vector<64x32xbf16>,
    %c0_14 = arith.constant 0 : index
    %c0_15 = arith.constant 0 : index
    %15 = vector.load %arg6[%c0_14, %c0_15] : memref<32x32xbf16, #tpu.memory_space<vmem>>, vector<32x32xbf16>
    %cst_16 = arith.constant dense<0.000000e+00> : vector<64x32xf32>
    %16 = tpu.matmul %0, %15, %cst_16 {dimension_numbers = #tpu.dot_dimension_numbers<[1], [0], [0], [1], [0, 0, 1, 1], [], []>} : vector<64x32xbf16>, vector<32x32xbf16>, vector<64x32xf32> -> vector<64x32xf32>
    %c0_17 = arith.constant 0 : index
    %c0_18 = arith.constant 0 : index
    %17 = vector.load %arg7[%c0_17, %c0_18] : memref<1x32xf32, #tpu.memory_space<vmem>>, vector<1x32xf32>
    %18 = vector.broadcast %17 : vector<1x32xf32> to vector<64x32xf32>
    %19 = arith.addf %16, %18 : vector<64x32xf32>
    %20 = arith.truncf %19 : vector<64x32xf32> to vector<64x32xbf16>
    %c0_19 = arith.constant 0 : index
    %c0_20 = arith.constant 0 : index
    %21 = vector.load %arg10[%c0_19, %c0_20] : memref<64x32xbf16, #tpu.memory_space<vmem>>, vector<64x32xbf16>
    tpu.vector_store %arg10[%c0_19, %c0_20], %20 {strides = array<i32>} : memref<64x32xbf16, #tpu.memory_space<vmem>>, vector<64x32xbf16>,
    return
  }
  func.func @transform_0(%arg0: i32) -> (i32, i32) {
    %c0_i32 = arith.constant 0 : i32
    %c0_i32_0 = arith.constant 0 : i32
    return %arg0, %c0_i32 : i32, i32
  }
  func.func @transform_1(%arg0: i32) -> (i32, i32) {
    %c0_i32 = arith.constant 0 : i32
    %c0_i32_0 = arith.constant 0 : i32
    %c0_i32_1 = arith.constant 0 : i32
    return %c0_i32, %c0_i32_0 : i32, i32
  }
  func.func @transform_2(%arg0: i32) -> (i32, i32) {
    %c0_i32 = arith.constant 0 : i32
    %c0_i32_0 = arith.constant 0 : i32
    %c0_i32_1 = arith.constant 0 : i32
    return %c0_i32, %c0_i32_0 : i32, i32
  }
  func.func @transform_3(%arg0: i32) -> (i32, i32) {
    %c0_i32 = arith.constant 0 : i32
    %c0_i32_0 = arith.constant 0 : i32
    %c0_i32_1 = arith.constant 0 : i32
    return %c0_i32, %c0_i32_0 : i32, i32
  }
  func.func @transform_4(%arg0: i32) -> (i32, i32) {
    %c0_i32 = arith.constant 0 : i32
    %c0_i32_0 = arith.constant 0 : i32
    %c0_i32_1 = arith.constant 0 : i32
    return %c0_i32, %c0_i32_0 : i32, i32
  }
  func.func @transform_5(%arg0: i32) -> (i32, i32) {
    %c0_i32 = arith.constant 0 : i32
    %c0_i32_0 = arith.constant 0 : i32
    %c0_i32_1 = arith.constant 0 : i32
    return %c0_i32, %c0_i32_0 : i32, i32
  }
  func.func @transform_6(%arg0: i32) -> (i32, i32) {
    %c0_i32 = arith.constant 0 : i32
    %c0_i32_0 = arith.constant 0 : i32
    %c0_i32_1 = arith.constant 0 : i32
    return %c0_i32, %c0_i32_0 : i32, i32
  }
  func.func @transform_7(%arg0: i32) -> (i32, i32) {
    %c0_i32 = arith.constant 0 : i32
    %c0_i32_0 = arith.constant 0 : i32
    return %arg0, %c0_i32 : i32, i32
  }
  func.func @transform_8(%arg0: i32) -> (i32, i32) {
    %c0_i32 = arith.constant 0 : i32
    %c0_i32_0 = arith.constant 0 : i32
    return %arg0, %c0_i32 : i32, i32
  }
  func.func @transform_9(%arg0: i32) -> (i32, i32) {
    %c0_i32 = arith.constant 0 : i32
    %c0_i32_0 = arith.constant 0 : i32
    return %arg0, %c0_i32 : i32, i32
  }
}

module attributes {stable_mosaic.version = 11 : i64} {
  func.func @flash_attn_kernel(%arg0: i32, %arg1: i32, %arg2: i32, %arg3: i32, %arg4: memref<1x32x32xbf16, #tpu.memory_space<vmem>>, %arg5: memref<1x32x32xbf16, #tpu.memory_space<vmem>>, %arg6: memref<1x32x32xbf16, #tpu.memory_space<vmem>>, %arg7: memref<1x32x32xbf16, #tpu.memory_space<vmem>>, %arg8: memref<4x32x1xf32, #tpu.memory_space<vmem>>, %arg9: memref<4x32x1xf32, #tpu.memory_space<vmem>>, %arg10: memref<4x32x8xf32, #tpu.memory_space<vmem>>) attributes {dimension_semantics = [#tpu.dimension_semantics<parallel>, #tpu.dimension_semantics<parallel>, #tpu.dimension_semantics<parallel>, #tpu.dimension_semantics<arbitrary>], iteration_bounds = array<i64: 2, 1, 2, 2>, scalar_prefetch = 0 : i64, scratch_operands = 3 : i64, tpu.core_type = #tpu.core_type<tc>, window_params = [{transform_indices = @transform_0, window_bounds = array<i64: 1, 32, 32>}, {transform_indices = @transform_1, window_bounds = array<i64: 1, 32, 32>}, {transform_indices = @transform_2, window_bounds = array<i64: 1, 32, 32>}, {transform_indices = @transform_3, window_bounds = array<i64: 1, 32, 32>}]} {
    %c0_i32 = arith.constant 0 : i32
    %0 = arith.cmpi eq, %arg3, %c0_i32 : i32
    %1 = arith.extui %0 : i1 to i32
    %c0_i32_0 = arith.constant 0 : i32
    %2 = arith.cmpi ne, %1, %c0_i32_0 : i32
    scf.if %2 {
      %cst_94 = arith.constant 0xFF800000 : f32
      %156 = vector.broadcast %cst_94 : f32 to vector<4x32x1xf32>
      %c0_95 = arith.constant 0 : index
      %c0_96 = arith.constant 0 : index
      %c0_97 = arith.constant 0 : index
      %157 = vector.load %arg8[%c0_95, %c0_96, %c0_97] : memref<4x32x1xf32, #tpu.memory_space<vmem>>, vector<4x32x1xf32>
      tpu.vector_store %arg8[%c0_95, %c0_96, %c0_97], %156 {strides = array<i32>} : memref<4x32x1xf32, #tpu.memory_space<vmem>>, vector<4x32x1xf32>,
      %cst_98 = arith.constant 0.000000e+00 : f32
      %158 = vector.broadcast %cst_98 : f32 to vector<4x32x1xf32>
      %c0_99 = arith.constant 0 : index
      %c0_100 = arith.constant 0 : index
      %c0_101 = arith.constant 0 : index
      %159 = vector.load %arg9[%c0_99, %c0_100, %c0_101] : memref<4x32x1xf32, #tpu.memory_space<vmem>>, vector<4x32x1xf32>
      tpu.vector_store %arg9[%c0_99, %c0_100, %c0_101], %158 {strides = array<i32>} : memref<4x32x1xf32, #tpu.memory_space<vmem>>, vector<4x32x1xf32>,
      %cst_102 = arith.constant 0.000000e+00 : f32
      %160 = vector.broadcast %cst_102 : f32 to vector<4x32x8xf32>
      %c0_103 = arith.constant 0 : index
      %c0_104 = arith.constant 0 : index
      %c0_105 = arith.constant 0 : index
      %161 = vector.load %arg10[%c0_103, %c0_104, %c0_105] : memref<4x32x8xf32, #tpu.memory_space<vmem>>, vector<4x32x8xf32>
      tpu.vector_store %arg10[%c0_103, %c0_104, %c0_105], %160 {strides = array<i32>} : memref<4x32x8xf32, #tpu.memory_space<vmem>>, vector<4x32x8xf32>,
    } else {
    }
    %c0 = arith.constant 0 : index
    %c0_1 = arith.constant 0 : index
    %c0_2 = arith.constant 0 : index
    %3 = vector.load %arg4[%c0, %c0_1, %c0_2] : memref<1x32x32xbf16, #tpu.memory_space<vmem>>, vector<1x32x32xbf16>
    %4 = vector.shape_cast %3 : vector<1x32x32xbf16> to vector<32x32xbf16>
    %c0_3 = arith.constant 0 : index
    %c0_4 = arith.constant 0 : index
    %c0_5 = arith.constant 0 : index
    %5 = vector.load %arg5[%c0_3, %c0_4, %c0_5] : memref<1x32x32xbf16, #tpu.memory_space<vmem>>, vector<1x32x32xbf16>
    %6 = vector.shape_cast %5 : vector<1x32x32xbf16> to vector<32x32xbf16>
    %c0_6 = arith.constant 0 : index
    %c0_7 = arith.constant 0 : index
    %c0_8 = arith.constant 0 : index
    %7 = vector.load %arg6[%c0_6, %c0_7, %c0_8] : memref<1x32x32xbf16, #tpu.memory_space<vmem>>, vector<1x32x32xbf16>
    %8 = vector.shape_cast %7 : vector<1x32x32xbf16> to vector<32x32xbf16>
    %9 = vector.extract_strided_slice %4 {offsets = [0, 0], sizes = [32, 8], strides = [1, 1]} : vector<32x32xbf16> to vector<32x8xbf16>
    %10 = vector.extract_strided_slice %6 {offsets = [0, 0], sizes = [32, 8], strides = [1, 1]} : vector<32x32xbf16> to vector<32x8xbf16>
    %cst = arith.constant dense<0.000000e+00> : vector<32x32xf32>
    %11 = tpu.matmul %9, %10, %cst {dimension_numbers = #tpu.dot_dimension_numbers<[1], [1], [0], [0], [0, 0, 1, 0], [], []>} : vector<32x8xbf16>, vector<32x8xbf16>, vector<32x32xf32> -> vector<32x32xf32>
    %c0_9 = arith.constant 0 : index
    %c0_10 = arith.constant 0 : index
    %c0_11 = arith.constant 0 : index
    %12 = vector.load %arg8[%c0_9, %c0_10, %c0_11] : memref<4x32x1xf32, #tpu.memory_space<vmem>>, vector<1x32x1xf32>
    %13 = vector.shape_cast %12 : vector<1x32x1xf32> to vector<32x1xf32>
    %cst_12 = arith.constant dense<0xFF800000> : vector<32xf32>
    %14 = vector.multi_reduction <maximumf>, %11, %cst_12 [1] : vector<32x32xf32> to vector<32xf32>
    %15 = vector.shape_cast %14 : vector<32xf32> to vector<32x1xf32>
    %16 = arith.maximumf %13, %15 : vector<32x1xf32>
    %17 = arith.subf %13, %16 : vector<32x1xf32>
    %18 = math.exp2 %17 : vector<32x1xf32>
    %19 = vector.broadcast %16 : vector<32x1xf32> to vector<32x32xf32>
    %20 = arith.subf %11, %19 : vector<32x32xf32>
    %21 = math.exp2 %20 : vector<32x32xf32>
    %c0_13 = arith.constant 0 : index
    %c0_14 = arith.constant 0 : index
    %c0_15 = arith.constant 0 : index
    %22 = vector.load %arg9[%c0_13, %c0_14, %c0_15] : memref<4x32x1xf32, #tpu.memory_space<vmem>>, vector<1x32x1xf32>
    %23 = vector.shape_cast %22 : vector<1x32x1xf32> to vector<32x1xf32>
    %24 = arith.mulf %18, %23 : vector<32x1xf32>
    %cst_16 = arith.constant dense<0.000000e+00> : vector<32xf32>
    %25 = vector.multi_reduction <add>, %21, %cst_16 [1] : vector<32x32xf32> to vector<32xf32>
    %26 = vector.shape_cast %25 : vector<32xf32> to vector<32x1xf32>
    %27 = arith.addf %24, %26 : vector<32x1xf32>
    %c0_17 = arith.constant 0 : index
    %c0_18 = arith.constant 0 : index
    %c0_19 = arith.constant 0 : index
    %28 = vector.load %arg9[%c0_17, %c0_18, %c0_19] : memref<4x32x1xf32, #tpu.memory_space<vmem>>, vector<1x32x1xf32>
    %29 = vector.shape_cast %28 : vector<1x32x1xf32> to vector<32x1xf32>
    %30 = vector.shape_cast %27 : vector<32x1xf32> to vector<1x32x1xf32>
    tpu.vector_store %arg9[%c0_17, %c0_18, %c0_19], %30 {strides = array<i32>} : memref<4x32x1xf32, #tpu.memory_space<vmem>>, vector<1x32x1xf32>,
    %c0_20 = arith.constant 0 : index
    %c0_21 = arith.constant 0 : index
    %c0_22 = arith.constant 0 : index
    %31 = vector.load %arg10[%c0_20, %c0_21, %c0_22] : memref<4x32x8xf32, #tpu.memory_space<vmem>>, vector<1x32x8xf32>
    %32 = vector.shape_cast %31 : vector<1x32x8xf32> to vector<32x8xf32>
    %33 = vector.broadcast %18 : vector<32x1xf32> to vector<32x8xf32>
    %34 = arith.mulf %33, %32 : vector<32x8xf32>
    %35 = arith.truncf %21 : vector<32x32xf32> to vector<32x32xbf16>
    %36 = vector.extract_strided_slice %8 {offsets = [0, 0], sizes = [32, 8], strides = [1, 1]} : vector<32x32xbf16> to vector<32x8xbf16>
    %cst_23 = arith.constant dense<0.000000e+00> : vector<32x8xf32>
    %37 = tpu.matmul %35, %36, %cst_23 {dimension_numbers = #tpu.dot_dimension_numbers<[1], [0], [0], [1], [0, 0, 1, 1], [], []>} : vector<32x32xbf16>, vector<32x8xbf16>, vector<32x8xf32> -> vector<32x8xf32>
    %38 = arith.addf %34, %37 : vector<32x8xf32>
    %c0_24 = arith.constant 0 : index
    %c0_25 = arith.constant 0 : index
    %c0_26 = arith.constant 0 : index
    %39 = vector.load %arg10[%c0_24, %c0_25, %c0_26] : memref<4x32x8xf32, #tpu.memory_space<vmem>>, vector<1x32x8xf32>
    %40 = vector.shape_cast %39 : vector<1x32x8xf32> to vector<32x8xf32>
    %41 = vector.shape_cast %38 : vector<32x8xf32> to vector<1x32x8xf32>
    tpu.vector_store %arg10[%c0_24, %c0_25, %c0_26], %41 {strides = array<i32>} : memref<4x32x8xf32, #tpu.memory_space<vmem>>, vector<1x32x8xf32>,
    %c0_27 = arith.constant 0 : index
    %c0_28 = arith.constant 0 : index
    %c0_29 = arith.constant 0 : index
    %42 = vector.load %arg8[%c0_27, %c0_28, %c0_29] : memref<4x32x1xf32, #tpu.memory_space<vmem>>, vector<1x32x1xf32>
    %43 = vector.shape_cast %42 : vector<1x32x1xf32> to vector<32x1xf32>
    %44 = vector.shape_cast %16 : vector<32x1xf32> to vector<1x32x1xf32>
    tpu.vector_store %arg8[%c0_27, %c0_28, %c0_29], %44 {strides = array<i32>} : memref<4x32x1xf32, #tpu.memory_space<vmem>>, vector<1x32x1xf32>,
    %45 = vector.extract_strided_slice %4 {offsets = [0, 8], sizes = [32, 8], strides = [1, 1]} : vector<32x32xbf16> to vector<32x8xbf16>
    %46 = vector.extract_strided_slice %6 {offsets = [0, 8], sizes = [32, 8], strides = [1, 1]} : vector<32x32xbf16> to vector<32x8xbf16>
    %cst_30 = arith.constant dense<0.000000e+00> : vector<32x32xf32>
    %47 = tpu.matmul %45, %46, %cst_30 {dimension_numbers = #tpu.dot_dimension_numbers<[1], [1], [0], [0], [0, 0, 1, 0], [], []>} : vector<32x8xbf16>, vector<32x8xbf16>, vector<32x32xf32> -> vector<32x32xf32>
    %c1 = arith.constant 1 : index
    %c0_31 = arith.constant 0 : index
    %c0_32 = arith.constant 0 : index
    %48 = vector.load %arg8[%c1, %c0_31, %c0_32] : memref<4x32x1xf32, #tpu.memory_space<vmem>>, vector<1x32x1xf32>
    %49 = vector.shape_cast %48 : vector<1x32x1xf32> to vector<32x1xf32>
    %cst_33 = arith.constant dense<0xFF800000> : vector<32xf32>
    %50 = vector.multi_reduction <maximumf>, %47, %cst_33 [1] : vector<32x32xf32> to vector<32xf32>
    %51 = vector.shape_cast %50 : vector<32xf32> to vector<32x1xf32>
    %52 = arith.maximumf %49, %51 : vector<32x1xf32>
    %53 = arith.subf %49, %52 : vector<32x1xf32>
    %54 = math.exp2 %53 : vector<32x1xf32>
    %55 = vector.broadcast %52 : vector<32x1xf32> to vector<32x32xf32>
    %56 = arith.subf %47, %55 : vector<32x32xf32>
    %57 = math.exp2 %56 : vector<32x32xf32>
    %c1_34 = arith.constant 1 : index
    %c0_35 = arith.constant 0 : index
    %c0_36 = arith.constant 0 : index
    %58 = vector.load %arg9[%c1_34, %c0_35, %c0_36] : memref<4x32x1xf32, #tpu.memory_space<vmem>>, vector<1x32x1xf32>
    %59 = vector.shape_cast %58 : vector<1x32x1xf32> to vector<32x1xf32>
    %60 = arith.mulf %54, %59 : vector<32x1xf32>
    %cst_37 = arith.constant dense<0.000000e+00> : vector<32xf32>
    %61 = vector.multi_reduction <add>, %57, %cst_37 [1] : vector<32x32xf32> to vector<32xf32>
    %62 = vector.shape_cast %61 : vector<32xf32> to vector<32x1xf32>
    %63 = arith.addf %60, %62 : vector<32x1xf32>
    %c1_38 = arith.constant 1 : index
    %c0_39 = arith.constant 0 : index
    %c0_40 = arith.constant 0 : index
    %64 = vector.load %arg9[%c1_38, %c0_39, %c0_40] : memref<4x32x1xf32, #tpu.memory_space<vmem>>, vector<1x32x1xf32>
    %65 = vector.shape_cast %64 : vector<1x32x1xf32> to vector<32x1xf32>
    %66 = vector.shape_cast %63 : vector<32x1xf32> to vector<1x32x1xf32>
    tpu.vector_store %arg9[%c1_38, %c0_39, %c0_40], %66 {strides = array<i32>} : memref<4x32x1xf32, #tpu.memory_space<vmem>>, vector<1x32x1xf32>,
    %c1_41 = arith.constant 1 : index
    %c0_42 = arith.constant 0 : index
    %c0_43 = arith.constant 0 : index
    %67 = vector.load %arg10[%c1_41, %c0_42, %c0_43] : memref<4x32x8xf32, #tpu.memory_space<vmem>>, vector<1x32x8xf32>
    %68 = vector.shape_cast %67 : vector<1x32x8xf32> to vector<32x8xf32>
    %69 = vector.broadcast %54 : vector<32x1xf32> to vector<32x8xf32>
    %70 = arith.mulf %69, %68 : vector<32x8xf32>
    %71 = arith.truncf %57 : vector<32x32xf32> to vector<32x32xbf16>
    %72 = vector.extract_strided_slice %8 {offsets = [0, 8], sizes = [32, 8], strides = [1, 1]} : vector<32x32xbf16> to vector<32x8xbf16>
    %cst_44 = arith.constant dense<0.000000e+00> : vector<32x8xf32>
    %73 = tpu.matmul %71, %72, %cst_44 {dimension_numbers = #tpu.dot_dimension_numbers<[1], [0], [0], [1], [0, 0, 1, 1], [], []>} : vector<32x32xbf16>, vector<32x8xbf16>, vector<32x8xf32> -> vector<32x8xf32>
    %74 = arith.addf %70, %73 : vector<32x8xf32>
    %c1_45 = arith.constant 1 : index
    %c0_46 = arith.constant 0 : index
    %c0_47 = arith.constant 0 : index
    %75 = vector.load %arg10[%c1_45, %c0_46, %c0_47] : memref<4x32x8xf32, #tpu.memory_space<vmem>>, vector<1x32x8xf32>
    %76 = vector.shape_cast %75 : vector<1x32x8xf32> to vector<32x8xf32>
    %77 = vector.shape_cast %74 : vector<32x8xf32> to vector<1x32x8xf32>
    tpu.vector_store %arg10[%c1_45, %c0_46, %c0_47], %77 {strides = array<i32>} : memref<4x32x8xf32, #tpu.memory_space<vmem>>, vector<1x32x8xf32>,
    %c1_48 = arith.constant 1 : index
    %c0_49 = arith.constant 0 : index
    %c0_50 = arith.constant 0 : index
    %78 = vector.load %arg8[%c1_48, %c0_49, %c0_50] : memref<4x32x1xf32, #tpu.memory_space<vmem>>, vector<1x32x1xf32>
    %79 = vector.shape_cast %78 : vector<1x32x1xf32> to vector<32x1xf32>
    %80 = vector.shape_cast %52 : vector<32x1xf32> to vector<1x32x1xf32>
    tpu.vector_store %arg8[%c1_48, %c0_49, %c0_50], %80 {strides = array<i32>} : memref<4x32x1xf32, #tpu.memory_space<vmem>>, vector<1x32x1xf32>,
    %81 = vector.extract_strided_slice %4 {offsets = [0, 16], sizes = [32, 8], strides = [1, 1]} : vector<32x32xbf16> to vector<32x8xbf16>
    %82 = vector.extract_strided_slice %6 {offsets = [0, 16], sizes = [32, 8], strides = [1, 1]} : vector<32x32xbf16> to vector<32x8xbf16>
    %cst_51 = arith.constant dense<0.000000e+00> : vector<32x32xf32>
    %83 = tpu.matmul %81, %82, %cst_51 {dimension_numbers = #tpu.dot_dimension_numbers<[1], [1], [0], [0], [0, 0, 1, 0], [], []>} : vector<32x8xbf16>, vector<32x8xbf16>, vector<32x32xf32> -> vector<32x32xf32>
    %c2 = arith.constant 2 : index
    %c0_52 = arith.constant 0 : index
    %c0_53 = arith.constant 0 : index
    %84 = vector.load %arg8[%c2, %c0_52, %c0_53] : memref<4x32x1xf32, #tpu.memory_space<vmem>>, vector<1x32x1xf32>
    %85 = vector.shape_cast %84 : vector<1x32x1xf32> to vector<32x1xf32>
    %cst_54 = arith.constant dense<0xFF800000> : vector<32xf32>
    %86 = vector.multi_reduction <maximumf>, %83, %cst_54 [1] : vector<32x32xf32> to vector<32xf32>
    %87 = vector.shape_cast %86 : vector<32xf32> to vector<32x1xf32>
    %88 = arith.maximumf %85, %87 : vector<32x1xf32>
    %89 = arith.subf %85, %88 : vector<32x1xf32>
    %90 = math.exp2 %89 : vector<32x1xf32>
    %91 = vector.broadcast %88 : vector<32x1xf32> to vector<32x32xf32>
    %92 = arith.subf %83, %91 : vector<32x32xf32>
    %93 = math.exp2 %92 : vector<32x32xf32>
    %c2_55 = arith.constant 2 : index
    %c0_56 = arith.constant 0 : index
    %c0_57 = arith.constant 0 : index
    %94 = vector.load %arg9[%c2_55, %c0_56, %c0_57] : memref<4x32x1xf32, #tpu.memory_space<vmem>>, vector<1x32x1xf32>
    %95 = vector.shape_cast %94 : vector<1x32x1xf32> to vector<32x1xf32>
    %96 = arith.mulf %90, %95 : vector<32x1xf32>
    %cst_58 = arith.constant dense<0.000000e+00> : vector<32xf32>
    %97 = vector.multi_reduction <add>, %93, %cst_58 [1] : vector<32x32xf32> to vector<32xf32>
    %98 = vector.shape_cast %97 : vector<32xf32> to vector<32x1xf32>
    %99 = arith.addf %96, %98 : vector<32x1xf32>
    %c2_59 = arith.constant 2 : index
    %c0_60 = arith.constant 0 : index
    %c0_61 = arith.constant 0 : index
    %100 = vector.load %arg9[%c2_59, %c0_60, %c0_61] : memref<4x32x1xf32, #tpu.memory_space<vmem>>, vector<1x32x1xf32>
    %101 = vector.shape_cast %100 : vector<1x32x1xf32> to vector<32x1xf32>
    %102 = vector.shape_cast %99 : vector<32x1xf32> to vector<1x32x1xf32>
    tpu.vector_store %arg9[%c2_59, %c0_60, %c0_61], %102 {strides = array<i32>} : memref<4x32x1xf32, #tpu.memory_space<vmem>>, vector<1x32x1xf32>,
    %c2_62 = arith.constant 2 : index
    %c0_63 = arith.constant 0 : index
    %c0_64 = arith.constant 0 : index
    %103 = vector.load %arg10[%c2_62, %c0_63, %c0_64] : memref<4x32x8xf32, #tpu.memory_space<vmem>>, vector<1x32x8xf32>
    %104 = vector.shape_cast %103 : vector<1x32x8xf32> to vector<32x8xf32>
    %105 = vector.broadcast %90 : vector<32x1xf32> to vector<32x8xf32>
    %106 = arith.mulf %105, %104 : vector<32x8xf32>
    %107 = arith.truncf %93 : vector<32x32xf32> to vector<32x32xbf16>
    %108 = vector.extract_strided_slice %8 {offsets = [0, 16], sizes = [32, 8], strides = [1, 1]} : vector<32x32xbf16> to vector<32x8xbf16>
    %cst_65 = arith.constant dense<0.000000e+00> : vector<32x8xf32>
    %109 = tpu.matmul %107, %108, %cst_65 {dimension_numbers = #tpu.dot_dimension_numbers<[1], [0], [0], [1], [0, 0, 1, 1], [], []>} : vector<32x32xbf16>, vector<32x8xbf16>, vector<32x8xf32> -> vector<32x8xf32>
    %110 = arith.addf %106, %109 : vector<32x8xf32>
    %c2_66 = arith.constant 2 : index
    %c0_67 = arith.constant 0 : index
    %c0_68 = arith.constant 0 : index
    %111 = vector.load %arg10[%c2_66, %c0_67, %c0_68] : memref<4x32x8xf32, #tpu.memory_space<vmem>>, vector<1x32x8xf32>
    %112 = vector.shape_cast %111 : vector<1x32x8xf32> to vector<32x8xf32>
    %113 = vector.shape_cast %110 : vector<32x8xf32> to vector<1x32x8xf32>
    tpu.vector_store %arg10[%c2_66, %c0_67, %c0_68], %113 {strides = array<i32>} : memref<4x32x8xf32, #tpu.memory_space<vmem>>, vector<1x32x8xf32>,
    %c2_69 = arith.constant 2 : index
    %c0_70 = arith.constant 0 : index
    %c0_71 = arith.constant 0 : index
    %114 = vector.load %arg8[%c2_69, %c0_70, %c0_71] : memref<4x32x1xf32, #tpu.memory_space<vmem>>, vector<1x32x1xf32>
    %115 = vector.shape_cast %114 : vector<1x32x1xf32> to vector<32x1xf32>
    %116 = vector.shape_cast %88 : vector<32x1xf32> to vector<1x32x1xf32>
    tpu.vector_store %arg8[%c2_69, %c0_70, %c0_71], %116 {strides = array<i32>} : memref<4x32x1xf32, #tpu.memory_space<vmem>>, vector<1x32x1xf32>,
    %117 = vector.extract_strided_slice %4 {offsets = [0, 24], sizes = [32, 8], strides = [1, 1]} : vector<32x32xbf16> to vector<32x8xbf16>
    %118 = vector.extract_strided_slice %6 {offsets = [0, 24], sizes = [32, 8], strides = [1, 1]} : vector<32x32xbf16> to vector<32x8xbf16>
    %cst_72 = arith.constant dense<0.000000e+00> : vector<32x32xf32>
    %119 = tpu.matmul %117, %118, %cst_72 {dimension_numbers = #tpu.dot_dimension_numbers<[1], [1], [0], [0], [0, 0, 1, 0], [], []>} : vector<32x8xbf16>, vector<32x8xbf16>, vector<32x32xf32> -> vector<32x32xf32>
    %c3 = arith.constant 3 : index
    %c0_73 = arith.constant 0 : index
    %c0_74 = arith.constant 0 : index
    %120 = vector.load %arg8[%c3, %c0_73, %c0_74] : memref<4x32x1xf32, #tpu.memory_space<vmem>>, vector<1x32x1xf32>
    %121 = vector.shape_cast %120 : vector<1x32x1xf32> to vector<32x1xf32>
    %cst_75 = arith.constant dense<0xFF800000> : vector<32xf32>
    %122 = vector.multi_reduction <maximumf>, %119, %cst_75 [1] : vector<32x32xf32> to vector<32xf32>
    %123 = vector.shape_cast %122 : vector<32xf32> to vector<32x1xf32>
    %124 = arith.maximumf %121, %123 : vector<32x1xf32>
    %125 = arith.subf %121, %124 : vector<32x1xf32>
    %126 = math.exp2 %125 : vector<32x1xf32>
    %127 = vector.broadcast %124 : vector<32x1xf32> to vector<32x32xf32>
    %128 = arith.subf %119, %127 : vector<32x32xf32>
    %129 = math.exp2 %128 : vector<32x32xf32>
    %c3_76 = arith.constant 3 : index
    %c0_77 = arith.constant 0 : index
    %c0_78 = arith.constant 0 : index
    %130 = vector.load %arg9[%c3_76, %c0_77, %c0_78] : memref<4x32x1xf32, #tpu.memory_space<vmem>>, vector<1x32x1xf32>
    %131 = vector.shape_cast %130 : vector<1x32x1xf32> to vector<32x1xf32>
    %132 = arith.mulf %126, %131 : vector<32x1xf32>
    %cst_79 = arith.constant dense<0.000000e+00> : vector<32xf32>
    %133 = vector.multi_reduction <add>, %129, %cst_79 [1] : vector<32x32xf32> to vector<32xf32>
    %134 = vector.shape_cast %133 : vector<32xf32> to vector<32x1xf32>
    %135 = arith.addf %132, %134 : vector<32x1xf32>
    %c3_80 = arith.constant 3 : index
    %c0_81 = arith.constant 0 : index
    %c0_82 = arith.constant 0 : index
    %136 = vector.load %arg9[%c3_80, %c0_81, %c0_82] : memref<4x32x1xf32, #tpu.memory_space<vmem>>, vector<1x32x1xf32>
    %137 = vector.shape_cast %136 : vector<1x32x1xf32> to vector<32x1xf32>
    %138 = vector.shape_cast %135 : vector<32x1xf32> to vector<1x32x1xf32>
    tpu.vector_store %arg9[%c3_80, %c0_81, %c0_82], %138 {strides = array<i32>} : memref<4x32x1xf32, #tpu.memory_space<vmem>>, vector<1x32x1xf32>,
    %c3_83 = arith.constant 3 : index
    %c0_84 = arith.constant 0 : index
    %c0_85 = arith.constant 0 : index
    %139 = vector.load %arg10[%c3_83, %c0_84, %c0_85] : memref<4x32x8xf32, #tpu.memory_space<vmem>>, vector<1x32x8xf32>
    %140 = vector.shape_cast %139 : vector<1x32x8xf32> to vector<32x8xf32>
    %141 = vector.broadcast %126 : vector<32x1xf32> to vector<32x8xf32>
    %142 = arith.mulf %141, %140 : vector<32x8xf32>
    %143 = arith.truncf %129 : vector<32x32xf32> to vector<32x32xbf16>
    %144 = vector.extract_strided_slice %8 {offsets = [0, 24], sizes = [32, 8], strides = [1, 1]} : vector<32x32xbf16> to vector<32x8xbf16>
    %cst_86 = arith.constant dense<0.000000e+00> : vector<32x8xf32>
    %145 = tpu.matmul %143, %144, %cst_86 {dimension_numbers = #tpu.dot_dimension_numbers<[1], [0], [0], [1], [0, 0, 1, 1], [], []>} : vector<32x32xbf16>, vector<32x8xbf16>, vector<32x8xf32> -> vector<32x8xf32>
    %146 = arith.addf %142, %145 : vector<32x8xf32>
    %c3_87 = arith.constant 3 : index
    %c0_88 = arith.constant 0 : index
    %c0_89 = arith.constant 0 : index
    %147 = vector.load %arg10[%c3_87, %c0_88, %c0_89] : memref<4x32x8xf32, #tpu.memory_space<vmem>>, vector<1x32x8xf32>
    %148 = vector.shape_cast %147 : vector<1x32x8xf32> to vector<32x8xf32>
    %149 = vector.shape_cast %146 : vector<32x8xf32> to vector<1x32x8xf32>
    tpu.vector_store %arg10[%c3_87, %c0_88, %c0_89], %149 {strides = array<i32>} : memref<4x32x8xf32, #tpu.memory_space<vmem>>, vector<1x32x8xf32>,
    %c3_90 = arith.constant 3 : index
    %c0_91 = arith.constant 0 : index
    %c0_92 = arith.constant 0 : index
    %150 = vector.load %arg8[%c3_90, %c0_91, %c0_92] : memref<4x32x1xf32, #tpu.memory_space<vmem>>, vector<1x32x1xf32>
    %151 = vector.shape_cast %150 : vector<1x32x1xf32> to vector<32x1xf32>
    %152 = vector.shape_cast %124 : vector<32x1xf32> to vector<1x32x1xf32>
    tpu.vector_store %arg8[%c3_90, %c0_91, %c0_92], %152 {strides = array<i32>} : memref<4x32x1xf32, #tpu.memory_space<vmem>>, vector<1x32x1xf32>,
    %c1_i32 = arith.constant 1 : i32
    %153 = arith.cmpi eq, %arg3, %c1_i32 : i32
    %154 = arith.extui %153 : i1 to i32
    %c0_i32_93 = arith.constant 0 : i32
    %155 = arith.cmpi ne, %154, %c0_i32_93 : i32
    scf.if %155 {
      %c0_94 = arith.constant 0 : index
      %c0_95 = arith.constant 0 : index
      %c0_96 = arith.constant 0 : index
      %156 = vector.load %arg10[%c0_94, %c0_95, %c0_96] : memref<4x32x8xf32, #tpu.memory_space<vmem>>, vector<1x32x8xf32>
      %157 = vector.shape_cast %156 : vector<1x32x8xf32> to vector<32x8xf32>
      %c0_97 = arith.constant 0 : index
      %c0_98 = arith.constant 0 : index
      %c0_99 = arith.constant 0 : index
      %158 = vector.load %arg9[%c0_97, %c0_98, %c0_99] : memref<4x32x1xf32, #tpu.memory_space<vmem>>, vector<1x32x1xf32>
      %159 = vector.shape_cast %158 : vector<1x32x1xf32> to vector<32x1xf32>
      %160 = tpu.reciprocal %159 {approx = true} : vector<32x1xf32> -> vector<32x1xf32>
      %161 = vector.broadcast %160 : vector<32x1xf32> to vector<32x8xf32>
      %162 = arith.mulf %157, %161 : vector<32x8xf32>
      %c1_100 = arith.constant 1 : index
      %c0_101 = arith.constant 0 : index
      %c0_102 = arith.constant 0 : index
      %163 = vector.load %arg10[%c1_100, %c0_101, %c0_102] : memref<4x32x8xf32, #tpu.memory_space<vmem>>, vector<1x32x8xf32>
      %164 = vector.shape_cast %163 : vector<1x32x8xf32> to vector<32x8xf32>
      %c1_103 = arith.constant 1 : index
      %c0_104 = arith.constant 0 : index
      %c0_105 = arith.constant 0 : index
      %165 = vector.load %arg9[%c1_103, %c0_104, %c0_105] : memref<4x32x1xf32, #tpu.memory_space<vmem>>, vector<1x32x1xf32>
      %166 = vector.shape_cast %165 : vector<1x32x1xf32> to vector<32x1xf32>
      %167 = tpu.reciprocal %166 {approx = true} : vector<32x1xf32> -> vector<32x1xf32>
      %168 = vector.broadcast %167 : vector<32x1xf32> to vector<32x8xf32>
      %169 = arith.mulf %164, %168 : vector<32x8xf32>
      %c2_106 = arith.constant 2 : index
      %c0_107 = arith.constant 0 : index
      %c0_108 = arith.constant 0 : index
      %170 = vector.load %arg10[%c2_106, %c0_107, %c0_108] : memref<4x32x8xf32, #tpu.memory_space<vmem>>, vector<1x32x8xf32>
      %171 = vector.shape_cast %170 : vector<1x32x8xf32> to vector<32x8xf32>
      %c2_109 = arith.constant 2 : index
      %c0_110 = arith.constant 0 : index
      %c0_111 = arith.constant 0 : index
      %172 = vector.load %arg9[%c2_109, %c0_110, %c0_111] : memref<4x32x1xf32, #tpu.memory_space<vmem>>, vector<1x32x1xf32>
      %173 = vector.shape_cast %172 : vector<1x32x1xf32> to vector<32x1xf32>
      %174 = tpu.reciprocal %173 {approx = true} : vector<32x1xf32> -> vector<32x1xf32>
      %175 = vector.broadcast %174 : vector<32x1xf32> to vector<32x8xf32>
      %176 = arith.mulf %171, %175 : vector<32x8xf32>
      %c3_112 = arith.constant 3 : index
      %c0_113 = arith.constant 0 : index
      %c0_114 = arith.constant 0 : index
      %177 = vector.load %arg10[%c3_112, %c0_113, %c0_114] : memref<4x32x8xf32, #tpu.memory_space<vmem>>, vector<1x32x8xf32>
      %178 = vector.shape_cast %177 : vector<1x32x8xf32> to vector<32x8xf32>
      %c3_115 = arith.constant 3 : index
      %c0_116 = arith.constant 0 : index
      %c0_117 = arith.constant 0 : index
      %179 = vector.load %arg9[%c3_115, %c0_116, %c0_117] : memref<4x32x1xf32, #tpu.memory_space<vmem>>, vector<1x32x1xf32>
      %180 = vector.shape_cast %179 : vector<1x32x1xf32> to vector<32x1xf32>
      %181 = tpu.reciprocal %180 {approx = true} : vector<32x1xf32> -> vector<32x1xf32>
      %182 = vector.broadcast %181 : vector<32x1xf32> to vector<32x8xf32>
      %183 = arith.mulf %178, %182 : vector<32x8xf32>
      %184 = tpu.concatenate %162, %169, %176, %183 in 1 : vector<32x8xf32>, vector<32x8xf32>, vector<32x8xf32>, vector<32x8xf32> -> vector<32x32xf32>
      %185 = arith.truncf %184 : vector<32x32xf32> to vector<32x32xbf16>
      %c0_118 = arith.constant 0 : index
      %c0_119 = arith.constant 0 : index
      %c0_120 = arith.constant 0 : index
      %186 = vector.load %arg7[%c0_118, %c0_119, %c0_120] : memref<1x32x32xbf16, #tpu.memory_space<vmem>>, vector<1x32x32xbf16>
      %187 = vector.shape_cast %186 : vector<1x32x32xbf16> to vector<32x32xbf16>
      %188 = vector.shape_cast %185 : vector<32x32xbf16> to vector<1x32x32xbf16>
      tpu.vector_store %arg7[%c0_118, %c0_119, %c0_120], %188 {strides = array<i32>} : memref<1x32x32xbf16, #tpu.memory_space<vmem>>, vector<1x32x32xbf16>,
    } else {
    }
    return
  }
  func.func @transform_0(%arg0: i32, %arg1: i32, %arg2: i32, %arg3: i32) -> (i32, i32, i32) {
    %c0_i32 = arith.constant 0 : i32
    return %arg0, %arg2, %arg1 : i32, i32, i32
  }
  func.func @transform_1(%arg0: i32, %arg1: i32, %arg2: i32, %arg3: i32) -> (i32, i32, i32) {
    %c0_i32 = arith.constant 0 : i32
    return %arg0, %arg3, %arg1 : i32, i32, i32
  }
  func.func @transform_2(%arg0: i32, %arg1: i32, %arg2: i32, %arg3: i32) -> (i32, i32, i32) {
    %c0_i32 = arith.constant 0 : i32
    return %arg0, %arg3, %arg1 : i32, i32, i32
  }
  func.func @transform_3(%arg0: i32, %arg1: i32, %arg2: i32, %arg3: i32) -> (i32, i32, i32) {
    %c0_i32 = arith.constant 0 : i32
    return %arg0, %arg2, %arg1 : i32, i32, i32
  }
}

</mosaic_0001>

<llo_original>
// kernel: attention_forward.5
$region0: #{attention_forward.5}
  #allocation0 [shape = 'u32[]', space=smem, size = 0x4, offset = 0x4, fixed_abs, tag = 'smem constant byte address 0x4 - core index']
  #allocation1 [shape = 'u32[72,128]{1,0:T(1,128)}', space=vmem, size = 0x9000, scoped, tag = 'internal scratch']
  %s0 = inlined_call_operand.vmem [shape: bf16[128,32], index: 0, kind: input, shape index: {}]
  %s1 = inlined_call_operand.vmem [shape: bf16[32,32], index: 1, kind: input, shape index: {}]
  %s2 = inlined_call_operand.vmem [shape: f32[1,32], index: 2, kind: input, shape index: {}]
  %s3 = inlined_call_operand.vmem [shape: f32[128,32], index: 3, kind: output, shape index: {}]
  %s4 = sld [smem:[#allocation0]]
  $region45: #{attention_forward.5} parent=0
    _
  %s6 = ssub.s32 1, %s4
  %s7 = scalar_select 0, %s6, %s4
  loop: start=0, step=1, limit=4
  $region2: #{attention_forward.5} parent=0 // loop_pre_header
    _
  $region3: #{attention_forward.5} parent=0 // loop_header
    %s9 = sphi 0, %s13
    %p10 = scmp.ge.s32.totalorder %s9, 4
    %s19 = sphi 0, %s21
    %s22 = sphi 0, %s19
    %s23 = sphi 0, %s22
    %s39 = sphi 0, %s23
    %s43 = sphi 0, %s43
    %s45 = sphi 0, %s43
    %s46 = sphi 0, %s45
    %s60 = sphi 0, %s46
    %s64 = sphi 0, %s64
    %s66 = sphi 0, %s64
    %s67 = sphi 0, %s66
    %s81 = sphi 0, %s67
    %s87 = sphi 0, %s89
    %s90 = sphi 0, %s87
    %s91 = sphi 0, %s90
    %s107 = sphi 0, %s91
  $region4: #{attention_forward.5} parent=0 // loop_header_branch
    %12 = sbr.rel (%p10) target = $region8
  $region5: #{attention_forward.5} parent=0 // loop_body
    %s14 = ssub.s32 %s9, 1
    %s15 = ssub.s32 %s9, 2
    %s16 = sadd.s32 %s9, 1
    %s17 = ssub.s32 %s9, %s16
    %p18 = scmp.eq.s32.totalorder %s17, 0
    %s20 = sadd.s32 %s19, 1
    %s21 = scalar_select %p18, %s19, %s20
    %p24 = pneg %p18
    %p25 = scmp.eq.s32.totalorder %s9, 1
    %p26 = por %p24, %p25
    %p27 = scmp.ne.s32.totalorder %s19, %s22
    %p28 = scmp.eq.s32.totalorder %s9, 0
    %p29 = por %p27, %p28
    %p30 = scmp.ne.s32.totalorder %s19, %s22
    %p31 = scmp.eq.s32.totalorder %s14, 1
    %p32 = por %p30, %p31
    %p33 = scmp.ne.s32.totalorder %s22, %s23
    %p34 = scmp.eq.s32.totalorder %s14, 0
    %p35 = por %p33, %p34
    %p36 = scmp.ne.s32.totalorder %s22, %s23
    %p37 = scmp.eq.s32.totalorder %s15, 1
    %p38 = por %p36, %p37
    %p40 = scmp.ne.s32.totalorder %s23, %s39
    %p41 = scmp.eq.s32.totalorder %s15, 0
    %p42 = por %p40, %p41
    %s44 = sadd.s32 %s43, 1
    %p47 = scmp.eq.s32.totalorder %s9, 1
    %p48 = scmp.ne.s32.totalorder %s43, %s45
    %p49 = scmp.eq.s32.totalorder %s9, 0
    %p50 = por %p48, %p49
    %p51 = scmp.ne.s32.totalorder %s43, %s45
    %p52 = scmp.eq.s32.totalorder %s14, 1
    %p53 = por %p51, %p52
    %p54 = scmp.ne.s32.totalorder %s45, %s46
    %p55 = scmp.eq.s32.totalorder %s14, 0
    %p56 = por %p54, %p55
    %p57 = scmp.ne.s32.totalorder %s45, %s46
    %p58 = scmp.eq.s32.totalorder %s15, 1
    %p59 = por %p57, %p58
    %p61 = scmp.ne.s32.totalorder %s46, %s60
    %p62 = scmp.eq.s32.totalorder %s15, 0
    %p63 = por %p61, %p62
    %s65 = sadd.s32 %s64, 1
    %p68 = scmp.eq.s32.totalorder %s9, 1
    %p69 = scmp.ne.s32.totalorder %s64, %s66
    %p70 = scmp.eq.s32.totalorder %s9, 0
    %p71 = por %p69, %p70
    %p72 = scmp.ne.s32.totalorder %s64, %s66
    %p73 = scmp.eq.s32.totalorder %s14, 1
    %p74 = por %p72, %p73
    %p75 = scmp.ne.s32.totalorder %s66, %s67
    %p76 = scmp.eq.s32.totalorder %s14, 0
    %p77 = por %p75, %p76
    %p78 = scmp.ne.s32.totalorder %s66, %s67
    %p79 = scmp.eq.s32.totalorder %s15, 1
    %p80 = por %p78, %p79
    %p82 = scmp.ne.s32.totalorder %s67, %s81
    %p83 = scmp.eq.s32.totalorder %s15, 0
    %p84 = por %p82, %p83
    %s85 = ssub.s32 %s9, %s16
    %p86 = scmp.eq.s32.totalorder %s85, 0
    %s88 = sadd.s32 %s87, 1
    %s89 = scalar_select %p86, %s87, %s88
    %p92 = pneg %p86
    %p93 = scmp.eq.s32.totalorder %s9, 1
    %p94 = por %p92, %p93
    %p95 = scmp.ne.s32.totalorder %s87, %s90
    %p96 = scmp.eq.s32.totalorder %s9, 0
    %p97 = por %p95, %p96
    %p98 = scmp.ne.s32.totalorder %s87, %s90
    %p99 = scmp.eq.s32.totalorder %s14, 1
    %p100 = por %p98, %p99
    %p101 = scmp.ne.s32.totalorder %s90, %s91
    %p102 = scmp.eq.s32.totalorder %s14, 0
    %p103 = por %p101, %p102
    %p104 = scmp.ne.s32.totalorder %s90, %s91
    %p105 = scmp.eq.s32.totalorder %s15, 1
    %p106 = por %p104, %p105
    %p108 = scmp.ne.s32.totalorder %s91, %s107
    %p109 = scmp.eq.s32.totalorder %s15, 0
    %p110 = por %p108, %p109
    %p111 = scmp.le.s32.totalorder 1, %s9
    %p112 = scmp.lt.s32.totalorder %s9, 3
    %p113 = pnand %p111, %p112
    %p114 = pneg %p113
    // Predicated region
    $region9: #{attention_forward.5} parent=5 // pred_check
      _
    $region10: #{attention_forward.5} parent=5 // pred_check_branch
      %116 = sbr.rel (%p113) target = $region12
    $region11: #{attention_forward.5} parent=5 // pred_region
      %s117 = ssub.s32 %s9, 1
      // Predicated region
      $region13: #{attention_forward.5} parent=11 // pred_check
        %p118 = pneg %p56
      $region14: #{attention_forward.5} parent=11 // pred_check_branch
        %120 = sbr.rel (%p118) target = $region16
      $region15: #{attention_forward.5} parent=11 // pred_region
        _
      $region16: #{attention_forward.5} parent=11 // pred_fallthru
        _
      // Predicated region
      $region17: #{attention_forward.5} parent=11 // pred_check
        %p121 = pneg %p77
      $region18: #{attention_forward.5} parent=11 // pred_check_branch
        %123 = sbr.rel (%p121) target = $region20
      $region19: #{attention_forward.5} parent=11 // pred_region
        _
      $region20: #{attention_forward.5} parent=11 // pred_fallthru
        _
    $region12: #{attention_forward.5} parent=5 // pred_fallthru
      _
    %p124 = scmp.lt.s32.totalorder %s9, 2
    // Predicated region
    $region21: #{attention_forward.5} parent=5 // pred_check
      %p125 = pneg %p124
    $region22: #{attention_forward.5} parent=5 // pred_check_branch
      %127 = sbr.rel (%p125) target = $region24
    $region23: #{attention_forward.5} parent=5 // pred_region
      // Predicated region
      $region25: #{attention_forward.5} parent=23 // pred_check
        %p128 = pneg %p29
      $region26: #{attention_forward.5} parent=23 // pred_check_branch
        %130 = sbr.rel (%p128) target = $region28
      $region27: #{attention_forward.5} parent=23 // pred_region
        %s131 = smul.u32 8, %s9
        %p132 = scmp.lt.s32.totalorder %s131, 15
        %s133 = scalar_select %p132, %s131, 15
        %s134 = smul.addr %s133, 4
        %s135 = scalar_lea.vmem %s0, %s134
        %s136 = smul.u32 8, %s9
      $region28: #{attention_forward.5} parent=23 // pred_fallthru
        _
    $region24: #{attention_forward.5} parent=5 // pred_fallthru
      _
    %p137 = scmp.le.s32.totalorder 1, %s9
    %p138 = scmp.lt.s32.totalorder %s9, 3
    %p139 = pnand %p137, %p138
    %p140 = pneg %p139
    // Predicated region
    $region29: #{attention_forward.5} parent=5 // pred_check
      _
    $region30: #{attention_forward.5} parent=5 // pred_check_branch
      %142 = sbr.rel (%p139) target = $region32
    $region31: #{attention_forward.5} parent=5 // pred_region
      %s143 = ssub.s32 %s9, 1
      %s144 = smul.u32 8, %s14
      %p145 = scmp.lt.s32.totalorder %s144, 15
      %s146 = scalar_select %p145, %s144, 15
      %s147 = smul.addr %s146, 4
      %s148 = scalar_lea.vmem %s0, %s147
      %p149 = pneg %p35
      %p150 = pneg %p32
      %p151 = pneg %p56
      %p152 = pneg %p53
      %p153 = pneg %p77
      %p154 = pneg %p74
      %p155 = pneg %p103
      %p156 = pneg %p100
      %s157 = smul.u32 8, %s14
      %p158 = scmp.lt.s32.totalorder %s157, 15
      %s159 = scalar_select %p158, %s157, 15
      %s160 = smul.addr %s159, 8
      %s161 = scalar_lea.vmem %s3, %s160
      %s162 = smul.u32 8, %s14
      %p163 = scmp.lt.s32.totalorder %s162, 15
      %s164 = scalar_select %p163, %s162, 15
      %s165 = smul.addr %s164, 4
      %s166 = scalar_lea.vmem %s0, %s165
      %s167 = smul.u32 8, %s14
      %s168 = smul.u32 8, %s14
      %p169 = scmp.lt.s32.totalorder %s168, 15
      %s170 = scalar_select %p169, %s168, 15
      %s171 = smul.addr %s170, 8
      %s172 = scalar_lea.vmem %s3, %s171
      %s173 = smul.u32 8, %s14
      %v175 = vld [vmem:[%s166] sm:$0xf]
      %v176 = vld [vmem:[%s166 + $0x4] sm:$0xf]
      %v177 = vld [vmem:[%s166 + $0x8] sm:$0xf]
      %v178 = vld [vmem:[%s166 + $0xc] sm:$0xf]
      %v179 = vld [vmem:[%s166 + $0x10] sm:$0xf]
      %v180 = vld [vmem:[%s166 + $0x14] sm:$0xf]
      %v181 = vld [vmem:[%s166 + $0x18] sm:$0xf]
      %v182 = vld [vmem:[%s166 + $0x1c] sm:$0xf]
      %v183 = vld [vmem:[%s1] sm:$0xf]
      %v184 = vld [vmem:[%s1 + $0x4] sm:$0xf]
      %v185 = vld [vmem:[%s1 + $0x8] sm:$0xf]
      %v186 = vld [vmem:[%s1 + $0xc] sm:$0xf]
      %v187 = vld [vmem:[%s2] sm:$0x1]
      %v189 = vperm.slane %v187, 0
      %v199 = vunpack.c.l.b16 %v175
      %v200 = vunpack.c.l.b16 %v176
      %v201 = vunpack.c.l.b16 %v177
      %v202 = vunpack.c.l.b16 %v178
      %v203 = vunpack.c.l.b16 %v179
      %v204 = vunpack.c.l.b16 %v180
      %v205 = vunpack.c.l.b16 %v181
      %v206 = vunpack.c.l.b16 %v182
      %v207 = vpack.c.b16 %v200, %v199
      %v208 = vpack.c.b16 %v202, %v201
      %v209 = vpack.c.b16 %v204, %v203
      %v210 = vpack.c.b16 %v206, %v205
      %v215 = vunpack.c.l.b16 %v183
      %v216 = vunpack.c.l.b16 %v184
      %v217 = vunpack.c.l.b16 %v185
      %v218 = vunpack.c.l.b16 %v186
      %v219 = vpack.c.b16 %v216, %v215
      %v220 = vpack.c.b16 %v218, %v217
      %vm223 = vcmask 261120
      %v225 = vsel %vm223, %v207, 0
      %v228 = vsel %vm223, %v208, 0
      %v231 = vsel %vm223, %v209, 0
      %v234 = vsel %vm223, %v210, 0
      %236 = vmatpush.bf16.msra.mxu0 0
      %237 = vmatpush.bf16.msra.mxu0 0
      %238 = vmatpush.bf16.msra.mxu0 0
      %239 = vmatpush.bf16.msra.mxu0 0
      %240 = vmatpush.bf16.msra.mxu0 0
      %241 = vmatpush.bf16.msra.mxu0 0
      %242 = vmatpush.bf16.msra.mxu0 %v220
      %243 = vmatpush.bf16.msra.mxu0 %v219
      %244 = vmatmul.bf16.gmra.mxu0 %v225
      %v245 = vpop.f32.mrf.mxu0
      %v246 = vadd.f32 %v189, %v245
      %v247 = vpop.f32.mrf.mxu0
      %v248 = vadd.f32 %v189, %v247
      %249 = vmatmul.bf16.gmra.mxu0 %v228
      %v250 = vpop.f32.mrf.mxu0
      %v251 = vadd.f32 %v189, %v250
      %v252 = vpop.f32.mrf.mxu0
      %v253 = vadd.f32 %v189, %v252
      %254 = vmatmul.bf16.gmra.mxu0 %v231
      %v255 = vpop.f32.mrf.mxu0
      %v256 = vadd.f32 %v189, %v255
      %v257 = vpop.f32.mrf.mxu0
      %v258 = vadd.f32 %v189, %v257
      %259 = vmatmul.bf16.gmra.mxu0 %v234
      %v260 = vpop.f32.mrf.mxu0
      %v261 = vadd.f32 %v189, %v260
      %v262 = vpop.f32.mrf.mxu0
      %v263 = vadd.f32 %v189, %v262
      %264 = vdwg.mxu0
      %265 = vst.msk [vmem:[%s172] sm:$0xff] %vm223, %v246
      %266 = vst.msk [vmem:[%s172 + $0x8] sm:$0xff] %vm223, %v248
      %267 = vst.msk [vmem:[%s172 + $0x10] sm:$0xff] %vm223, %v251
      %268 = vst.msk [vmem:[%s172 + $0x18] sm:$0xff] %vm223, %v253
      %269 = vst.msk [vmem:[%s172 + $0x20] sm:$0xff] %vm223, %v256
      %270 = vst.msk [vmem:[%s172 + $0x28] sm:$0xff] %vm223, %v258
      %271 = vst.msk [vmem:[%s172 + $0x30] sm:$0xff] %vm223, %v261
      %272 = vst.msk [vmem:[%s172 + $0x38] sm:$0xff] %vm223, %v263
      %s273 = smul.u32 8, %s14
      %p274 = scmp.lt.s32.totalorder %s273, 15
      %s275 = scalar_select %p274, %s273, 15
      %s276 = smul.addr %s275, 8
      %s277 = scalar_lea.vmem %s3, %s276
      // Predicated region
      $region33: #{attention_forward.5} parent=31 // pred_check
        %p278 = pneg %p100
      $region34: #{attention_forward.5} parent=31 // pred_check_branch
        %280 = sbr.rel (%p278) target = $region36
      $region35: #{attention_forward.5} parent=31 // pred_region
        %s281 = smul.u32 8, %s14
      $region36: #{attention_forward.5} parent=31 // pred_fallthru
        _
    $region32: #{attention_forward.5} parent=5 // pred_fallthru
      _
    %p282 = scmp.le.s32.totalorder 2, %s9
    // Predicated region
    $region37: #{attention_forward.5} parent=5 // pred_check
      %p283 = pneg %p282
    $region38: #{attention_forward.5} parent=5 // pred_check_branch
      %285 = sbr.rel (%p283) target = $region40
    $region39: #{attention_forward.5} parent=5 // pred_region
      %s286 = ssub.s32 %s9, 2
      // Predicated region
      $region41: #{attention_forward.5} parent=39 // pred_check
        %p287 = pneg %p106
      $region42: #{attention_forward.5} parent=39 // pred_check_branch
        %289 = sbr.rel (%p287) target = $region44
      $region43: #{attention_forward.5} parent=39 // pred_region
        %s290 = smul.u32 8, %s15
        %p291 = scmp.lt.s32.totalorder %s290, 15
        %s292 = scalar_select %p291, %s290, 15
        %s293 = smul.addr %s292, 8
        %s294 = scalar_lea.vmem %s3, %s293
      $region44: #{attention_forward.5} parent=39 // pred_fallthru
        _
    $region40: #{attention_forward.5} parent=5 // pred_fallthru
      _
  $region6: #{attention_forward.5} parent=0 // loop_footer
    %s13 = sadd.s32 1, %s9
  $region7: #{attention_forward.5} parent=0 // loop_footer_branch
    %8 = sbr.rel target = $region3
  $region8: #{attention_forward.5} parent=0 // loop_exit
    _

// kernel: attention_forward.3
$region0: #{attention_forward.3}
  #allocation0 [shape = 'u32[]', space=smem, size = 0x4, offset = 0x4, fixed_abs, tag = 'smem constant byte address 0x4 - core index']
  #allocation1 [shape = 'u32[72,128]{1,0:T(1,128)}', space=vmem, size = 0x9000, scoped, tag = 'internal scratch']
  %s0 = inlined_call_operand.vmem [shape: bf16[128,32], index: 0, kind: input, shape index: {}]
  %s1 = inlined_call_operand.vmem [shape: bf16[32,32], index: 1, kind: input, shape index: {}]
  %s2 = inlined_call_operand.vmem [shape: f32[1,32], index: 2, kind: input, shape index: {}]
  %s3 = inlined_call_operand.vmem [shape: bf16[32,32], index: 3, kind: input, shape index: {}]
  %s4 = inlined_call_operand.vmem [shape: f32[1,32], index: 4, kind: input, shape index: {}]
  %s5 = inlined_call_operand.vmem [shape: bf16[32,32], index: 5, kind: input, shape index: {}]
  %s6 = inlined_call_operand.vmem [shape: f32[1,32], index: 6, kind: input, shape index: {}]
  %s7 = inlined_call_operand.vmem [shape: bf16[128,32], index: 7, kind: output, shape index: {0}]
  %s8 = inlined_call_operand.vmem [shape: bf16[128,32], index: 8, kind: output, shape index: {1}]
  %s9 = inlined_call_operand.vmem [shape: bf16[128,32], index: 9, kind: output, shape index: {2}]
  %10 = xla_tuple %s7, %s8, %s9
  %s11 = sld [smem:[#allocation0]]
  $region77: #{attention_forward.3} parent=0
    _
  %s13 = ssub.s32 1, %s11
  %s14 = scalar_select 0, %s13, %s11
  loop: start=0, step=1, limit=4
  $region2: #{attention_forward.3} parent=0 // loop_pre_header
    _
  $region3: #{attention_forward.3} parent=0 // loop_header
    %s16 = sphi 0, %s20
    %p17 = scmp.ge.s32.totalorder %s16, 4
    %s26 = sphi 0, %s28
    %s29 = sphi 0, %s26
    %s30 = sphi 0, %s29
    %s46 = sphi 0, %s30
    %s50 = sphi 0, %s50
    %s52 = sphi 0, %s50
    %s53 = sphi 0, %s52
    %s67 = sphi 0, %s53
    %s71 = sphi 0, %s71
    %s73 = sphi 0, %s71
    %s74 = sphi 0, %s73
    %s88 = sphi 0, %s74
    %s92 = sphi 0, %s92
    %s94 = sphi 0, %s92
    %s95 = sphi 0, %s94
    %s109 = sphi 0, %s95
    %s113 = sphi 0, %s113
    %s115 = sphi 0, %s113
    %s116 = sphi 0, %s115
    %s130 = sphi 0, %s116
    %s134 = sphi 0, %s134
    %s136 = sphi 0, %s134
    %s137 = sphi 0, %s136
    %s151 = sphi 0, %s137
    %s155 = sphi 0, %s155
    %s157 = sphi 0, %s155
    %s158 = sphi 0, %s157
    %s172 = sphi 0, %s158
    %s178 = sphi 0, %s180
    %s181 = sphi 0, %s178
    %s182 = sphi 0, %s181
    %s198 = sphi 0, %s182
    %s204 = sphi 0, %s206
    %s207 = sphi 0, %s204
    %s208 = sphi 0, %s207
    %s224 = sphi 0, %s208
    %s230 = sphi 0, %s232
    %s233 = sphi 0, %s230
    %s234 = sphi 0, %s233
    %s250 = sphi 0, %s234
  $region4: #{attention_forward.3} parent=0 // loop_header_branch
    %19 = sbr.rel (%p17) target = $region8
  $region5: #{attention_forward.3} parent=0 // loop_body
    %s21 = ssub.s32 %s16, 1
    %s22 = ssub.s32 %s16, 2
    %s23 = sadd.s32 %s16, 1
    %s24 = ssub.s32 %s16, %s23
    %p25 = scmp.eq.s32.totalorder %s24, 0
    %s27 = sadd.s32 %s26, 1
    %s28 = scalar_select %p25, %s26, %s27
    %p31 = pneg %p25
    %p32 = scmp.eq.s32.totalorder %s16, 1
    %p33 = por %p31, %p32
    %p34 = scmp.ne.s32.totalorder %s26, %s29
    %p35 = scmp.eq.s32.totalorder %s16, 0
    %p36 = por %p34, %p35
    %p37 = scmp.ne.s32.totalorder %s26, %s29
    %p38 = scmp.eq.s32.totalorder %s21, 1
    %p39 = por %p37, %p38
    %p40 = scmp.ne.s32.totalorder %s29, %s30
    %p41 = scmp.eq.s32.totalorder %s21, 0
    %p42 = por %p40, %p41
    %p43 = scmp.ne.s32.totalorder %s29, %s30
    %p44 = scmp.eq.s32.totalorder %s22, 1
    %p45 = por %p43, %p44
    %p47 = scmp.ne.s32.totalorder %s30, %s46
    %p48 = scmp.eq.s32.totalorder %s22, 0
    %p49 = por %p47, %p48
    %s51 = sadd.s32 %s50, 1
    %p54 = scmp.eq.s32.totalorder %s16, 1
    %p55 = scmp.ne.s32.totalorder %s50, %s52
    %p56 = scmp.eq.s32.totalorder %s16, 0
    %p57 = por %p55, %p56
    %p58 = scmp.ne.s32.totalorder %s50, %s52
    %p59 = scmp.eq.s32.totalorder %s21, 1
    %p60 = por %p58, %p59
    %p61 = scmp.ne.s32.totalorder %s52, %s53
    %p62 = scmp.eq.s32.totalorder %s21, 0
    %p63 = por %p61, %p62
    %p64 = scmp.ne.s32.totalorder %s52, %s53
    %p65 = scmp.eq.s32.totalorder %s22, 1
    %p66 = por %p64, %p65
    %p68 = scmp.ne.s32.totalorder %s53, %s67
    %p69 = scmp.eq.s32.totalorder %s22, 0
    %p70 = por %p68, %p69
    %s72 = sadd.s32 %s71, 1
    %p75 = scmp.eq.s32.totalorder %s16, 1
    %p76 = scmp.ne.s32.totalorder %s71, %s73
    %p77 = scmp.eq.s32.totalorder %s16, 0
    %p78 = por %p76, %p77
    %p79 = scmp.ne.s32.totalorder %s71, %s73
    %p80 = scmp.eq.s32.totalorder %s21, 1
    %p81 = por %p79, %p80
    %p82 = scmp.ne.s32.totalorder %s73, %s74
    %p83 = scmp.eq.s32.totalorder %s21, 0
    %p84 = por %p82, %p83
    %p85 = scmp.ne.s32.totalorder %s73, %s74
    %p86 = scmp.eq.s32.totalorder %s22, 1
    %p87 = por %p85, %p86
    %p89 = scmp.ne.s32.totalorder %s74, %s88
    %p90 = scmp.eq.s32.totalorder %s22, 0
    %p91 = por %p89, %p90
    %s93 = sadd.s32 %s92, 1
    %p96 = scmp.eq.s32.totalorder %s16, 1
    %p97 = scmp.ne.s32.totalorder %s92, %s94
    %p98 = scmp.eq.s32.totalorder %s16, 0
    %p99 = por %p97, %p98
    %p100 = scmp.ne.s32.totalorder %s92, %s94
    %p101 = scmp.eq.s32.totalorder %s21, 1
    %p102 = por %p100, %p101
    %p103 = scmp.ne.s32.totalorder %s94, %s95
    %p104 = scmp.eq.s32.totalorder %s21, 0
    %p105 = por %p103, %p104
    %p106 = scmp.ne.s32.totalorder %s94, %s95
    %p107 = scmp.eq.s32.totalorder %s22, 1
    %p108 = por %p106, %p107
    %p110 = scmp.ne.s32.totalorder %s95, %s109
    %p111 = scmp.eq.s32.totalorder %s22, 0
    %p112 = por %p110, %p111
    %s114 = sadd.s32 %s113, 1
    %p117 = scmp.eq.s32.totalorder %s16, 1
    %p118 = scmp.ne.s32.totalorder %s113, %s115
    %p119 = scmp.eq.s32.totalorder %s16, 0
    %p120 = por %p118, %p119
    %p121 = scmp.ne.s32.totalorder %s113, %s115
    %p122 = scmp.eq.s32.totalorder %s21, 1
    %p123 = por %p121, %p122
    %p124 = scmp.ne.s32.totalorder %s115, %s116
    %p125 = scmp.eq.s32.totalorder %s21, 0
    %p126 = por %p124, %p125
    %p127 = scmp.ne.s32.totalorder %s115, %s116
    %p128 = scmp.eq.s32.totalorder %s22, 1
    %p129 = por %p127, %p128
    %p131 = scmp.ne.s32.totalorder %s116, %s130
    %p132 = scmp.eq.s32.totalorder %s22, 0
    %p133 = por %p131, %p132
    %s135 = sadd.s32 %s134, 1
    %p138 = scmp.eq.s32.totalorder %s16, 1
    %p139 = scmp.ne.s32.totalorder %s134, %s136
    %p140 = scmp.eq.s32.totalorder %s16, 0
    %p141 = por %p139, %p140
    %p142 = scmp.ne.s32.totalorder %s134, %s136
    %p143 = scmp.eq.s32.totalorder %s21, 1
    %p144 = por %p142, %p143
    %p145 = scmp.ne.s32.totalorder %s136, %s137
    %p146 = scmp.eq.s32.totalorder %s21, 0
    %p147 = por %p145, %p146
    %p148 = scmp.ne.s32.totalorder %s136, %s137
    %p149 = scmp.eq.s32.totalorder %s22, 1
    %p150 = por %p148, %p149
    %p152 = scmp.ne.s32.totalorder %s137, %s151
    %p153 = scmp.eq.s32.totalorder %s22, 0
    %p154 = por %p152, %p153
    %s156 = sadd.s32 %s155, 1
    %p159 = scmp.eq.s32.totalorder %s16, 1
    %p160 = scmp.ne.s32.totalorder %s155, %s157
    %p161 = scmp.eq.s32.totalorder %s16, 0
    %p162 = por %p160, %p161
    %p163 = scmp.ne.s32.totalorder %s155, %s157
    %p164 = scmp.eq.s32.totalorder %s21, 1
    %p165 = por %p163, %p164
    %p166 = scmp.ne.s32.totalorder %s157, %s158
    %p167 = scmp.eq.s32.totalorder %s21, 0
    %p168 = por %p166, %p167
    %p169 = scmp.ne.s32.totalorder %s157, %s158
    %p170 = scmp.eq.s32.totalorder %s22, 1
    %p171 = por %p169, %p170
    %p173 = scmp.ne.s32.totalorder %s158, %s172
    %p174 = scmp.eq.s32.totalorder %s22, 0
    %p175 = por %p173, %p174
    %s176 = ssub.s32 %s16, %s23
    %p177 = scmp.eq.s32.totalorder %s176, 0
    %s179 = sadd.s32 %s178, 1
    %s180 = scalar_select %p177, %s178, %s179
    %p183 = pneg %p177
    %p184 = scmp.eq.s32.totalorder %s16, 1
    %p185 = por %p183, %p184
    %p186 = scmp.ne.s32.totalorder %s178, %s181
    %p187 = scmp.eq.s32.totalorder %s16, 0
    %p188 = por %p186, %p187
    %p189 = scmp.ne.s32.totalorder %s178, %s181
    %p190 = scmp.eq.s32.totalorder %s21, 1
    %p191 = por %p189, %p190
    %p192 = scmp.ne.s32.totalorder %s181, %s182
    %p193 = scmp.eq.s32.totalorder %s21, 0
    %p194 = por %p192, %p193
    %p195 = scmp.ne.s32.totalorder %s181, %s182
    %p196 = scmp.eq.s32.totalorder %s22, 1
    %p197 = por %p195, %p196
    %p199 = scmp.ne.s32.totalorder %s182, %s198
    %p200 = scmp.eq.s32.totalorder %s22, 0
    %p201 = por %p199, %p200
    %s202 = ssub.s32 %s16, %s23
    %p203 = scmp.eq.s32.totalorder %s202, 0
    %s205 = sadd.s32 %s204, 1
    %s206 = scalar_select %p203, %s204, %s205
    %p209 = pneg %p203
    %p210 = scmp.eq.s32.totalorder %s16, 1
    %p211 = por %p209, %p210
    %p212 = scmp.ne.s32.totalorder %s204, %s207
    %p213 = scmp.eq.s32.totalorder %s16, 0
    %p214 = por %p212, %p213
    %p215 = scmp.ne.s32.totalorder %s204, %s207
    %p216 = scmp.eq.s32.totalorder %s21, 1
    %p217 = por %p215, %p216
    %p218 = scmp.ne.s32.totalorder %s207, %s208
    %p219 = scmp.eq.s32.totalorder %s21, 0
    %p220 = por %p218, %p219
    %p221 = scmp.ne.s32.totalorder %s207, %s208
    %p222 = scmp.eq.s32.totalorder %s22, 1
    %p223 = por %p221, %p222
    %p225 = scmp.ne.s32.totalorder %s208, %s224
    %p226 = scmp.eq.s32.totalorder %s22, 0
    %p227 = por %p225, %p226
    %s228 = ssub.s32 %s16, %s23
    %p229 = scmp.eq.s32.totalorder %s228, 0
    %s231 = sadd.s32 %s230, 1
    %s232 = scalar_select %p229, %s230, %s231
    %p235 = pneg %p229
    %p236 = scmp.eq.s32.totalorder %s16, 1
    %p237 = por %p235, %p236
    %p238 = scmp.ne.s32.totalorder %s230, %s233
    %p239 = scmp.eq.s32.totalorder %s16, 0
    %p240 = por %p238, %p239
    %p241 = scmp.ne.s32.totalorder %s230, %s233
    %p242 = scmp.eq.s32.totalorder %s21, 1
    %p243 = por %p241, %p242
    %p244 = scmp.ne.s32.totalorder %s233, %s234
    %p245 = scmp.eq.s32.totalorder %s21, 0
    %p246 = por %p244, %p245
    %p247 = scmp.ne.s32.totalorder %s233, %s234
    %p248 = scmp.eq.s32.totalorder %s22, 1
    %p249 = por %p247, %p248
    %p251 = scmp.ne.s32.totalorder %s234, %s250
    %p252 = scmp.eq.s32.totalorder %s22, 0
    %p253 = por %p251, %p252
    %p254 = scmp.le.s32.totalorder 1, %s16
    %p255 = scmp.lt.s32.totalorder %s16, 3
    %p256 = pnand %p254, %p255
    %p257 = pneg %p256
    // Predicated region
    $region9: #{attention_forward.3} parent=5 // pred_check
      _
    $region10: #{attention_forward.3} parent=5 // pred_check_branch
      %259 = sbr.rel (%p256) target = $region12
    $region11: #{attention_forward.3} parent=5 // pred_region
      %s260 = ssub.s32 %s16, 1
      // Predicated region
      $region13: #{attention_forward.3} parent=11 // pred_check
        %p261 = pneg %p63
      $region14: #{attention_forward.3} parent=11 // pred_check_branch
        %263 = sbr.rel (%p261) target = $region16
      $region15: #{attention_forward.3} parent=11 // pred_region
        _
      $region16: #{attention_forward.3} parent=11 // pred_fallthru
        _
      // Predicated region
      $region17: #{attention_forward.3} parent=11 // pred_check
        %p264 = pneg %p84
      $region18: #{attention_forward.3} parent=11 // pred_check_branch
        %266 = sbr.rel (%p264) target = $region20
      $region19: #{attention_forward.3} parent=11 // pred_region
        _
      $region20: #{attention_forward.3} parent=11 // pred_fallthru
        _
      // Predicated region
      $region21: #{attention_forward.3} parent=11 // pred_check
        %p267 = pneg %p105
      $region22: #{attention_forward.3} parent=11 // pred_check_branch
        %269 = sbr.rel (%p267) target = $region24
      $region23: #{attention_forward.3} parent=11 // pred_region
        _
      $region24: #{attention_forward.3} parent=11 // pred_fallthru
        _
      // Predicated region
      $region25: #{attention_forward.3} parent=11 // pred_check
        %p270 = pneg %p126
      $region26: #{attention_forward.3} parent=11 // pred_check_branch
        %272 = sbr.rel (%p270) target = $region28
      $region27: #{attention_forward.3} parent=11 // pred_region
        _
      $region28: #{attention_forward.3} parent=11 // pred_fallthru
        _
      // Predicated region
      $region29: #{attention_forward.3} parent=11 // pred_check
        %p273 = pneg %p147
      $region30: #{attention_forward.3} parent=11 // pred_check_branch
        %275 = sbr.rel (%p273) target = $region32
      $region31: #{attention_forward.3} parent=11 // pred_region
        _
      $region32: #{attention_forward.3} parent=11 // pred_fallthru
        _
      // Predicated region
      $region33: #{attention_forward.3} parent=11 // pred_check
        %p276 = pneg %p168
      $region34: #{attention_forward.3} parent=11 // pred_check_branch
        %278 = sbr.rel (%p276) target = $region36
      $region35: #{attention_forward.3} parent=11 // pred_region
        _
      $region36: #{attention_forward.3} parent=11 // pred_fallthru
        _
    $region12: #{attention_forward.3} parent=5 // pred_fallthru
      _
    %p279 = scmp.lt.s32.totalorder %s16, 2
    // Predicated region
    $region37: #{attention_forward.3} parent=5 // pred_check
      %p280 = pneg %p279
    $region38: #{attention_forward.3} parent=5 // pred_check_branch
      %282 = sbr.rel (%p280) target = $region40
    $region39: #{attention_forward.3} parent=5 // pred_region
      // Predicated region
      $region41: #{attention_forward.3} parent=39 // pred_check
        %p283 = pneg %p36
      $region42: #{attention_forward.3} parent=39 // pred_check_branch
        %285 = sbr.rel (%p283) target = $region44
      $region43: #{attention_forward.3} parent=39 // pred_region
        %s286 = smul.u32 8, %s16
        %p287 = scmp.lt.s32.totalorder %s286, 15
        %s288 = scalar_select %p287, %s286, 15
        %s289 = smul.addr %s288, 4
        %s290 = scalar_lea.vmem %s0, %s289
        %s291 = smul.u32 8, %s16
      $region44: #{attention_forward.3} parent=39 // pred_fallthru
        _
    $region40: #{attention_forward.3} parent=5 // pred_fallthru
      _
    %p292 = scmp.le.s32.totalorder 1, %s16
    %p293 = scmp.lt.s32.totalorder %s16, 3
    %p294 = pnand %p292, %p293
    %p295 = pneg %p294
    // Predicated region
    $region45: #{attention_forward.3} parent=5 // pred_check
      _
    $region46: #{attention_forward.3} parent=5 // pred_check_branch
      %297 = sbr.rel (%p294) target = $region48
    $region47: #{attention_forward.3} parent=5 // pred_region
      %s298 = ssub.s32 %s16, 1
      %s299 = smul.u32 8, %s21
      %p300 = scmp.lt.s32.totalorder %s299, 15
      %s301 = scalar_select %p300, %s299, 15
      %s302 = smul.addr %s301, 4
      %s303 = scalar_lea.vmem %s0, %s302
      %p304 = pneg %p42
      %p305 = pneg %p39
      %p306 = pneg %p63
      %p307 = pneg %p60
      %p308 = pneg %p84
      %p309 = pneg %p81
      %p310 = pneg %p105
      %p311 = pneg %p102
      %p312 = pneg %p126
      %p313 = pneg %p123
      %p314 = pneg %p147
      %p315 = pneg %p144
      %p316 = pneg %p168
      %p317 = pneg %p165
      %p318 = pneg %p194
      %p319 = pneg %p191
      %s320 = smul.u32 8, %s21
      %p321 = scmp.lt.s32.totalorder %s320, 15
      %s322 = scalar_select %p321, %s320, 15
      %s323 = smul.addr %s322, 4
      %s324 = scalar_lea.vmem %s7, %s323
      %p325 = pneg %p220
      %p326 = pneg %p217
      %s327 = smul.u32 8, %s21
      %p328 = scmp.lt.s32.totalorder %s327, 15
      %s329 = scalar_select %p328, %s327, 15
      %s330 = smul.addr %s329, 4
      %s331 = scalar_lea.vmem %s8, %s330
      %p332 = pneg %p246
      %p333 = pneg %p243
      %s334 = smul.u32 8, %s21
      %p335 = scmp.lt.s32.totalorder %s334, 15
      %s336 = scalar_select %p335, %s334, 15
      %s337 = smul.addr %s336, 4
      %s338 = scalar_lea.vmem %s9, %s337
      %s339 = smul.u32 8, %s21
      %p340 = scmp.lt.s32.totalorder %s339, 15
      %s341 = scalar_select %p340, %s339, 15
      %s342 = smul.addr %s341, 4
      %s343 = scalar_lea.vmem %s0, %s342
      %s344 = smul.u32 8, %s21
      %s345 = smul.u32 8, %s21
      %p346 = scmp.lt.s32.totalorder %s345, 15
      %s347 = scalar_select %p346, %s345, 15
      %s348 = smul.addr %s347, 4
      %s349 = scalar_lea.vmem %s7, %s348
      %s350 = smul.u32 8, %s21
      %s351 = smul.u32 8, %s21
      %p352 = scmp.lt.s32.totalorder %s351, 15
      %s353 = scalar_select %p352, %s351, 15
      %s354 = smul.addr %s353, 4
      %s355 = scalar_lea.vmem %s8, %s354
      %s356 = smul.u32 8, %s21
      %s357 = smul.u32 8, %s21
      %p358 = scmp.lt.s32.totalorder %s357, 15
      %s359 = scalar_select %p358, %s357, 15
      %s360 = smul.addr %s359, 4
      %s361 = scalar_lea.vmem %s9, %s360
      %s362 = smul.u32 8, %s21
      %v364 = vld [vmem:[%s343] sm:$0xf]
      %v365 = vld [vmem:[%s343 + $0x4] sm:$0xf]
      %v366 = vld [vmem:[%s343 + $0x8] sm:$0xf]
      %v367 = vld [vmem:[%s343 + $0xc] sm:$0xf]
      %v368 = vld [vmem:[%s343 + $0x10] sm:$0xf]
      %v369 = vld [vmem:[%s343 + $0x14] sm:$0xf]
      %v370 = vld [vmem:[%s343 + $0x18] sm:$0xf]
      %v371 = vld [vmem:[%s343 + $0x1c] sm:$0xf]
      %v372 = vld [vmem:[%s1] sm:$0xf]
      %v373 = vld [vmem:[%s1 + $0x4] sm:$0xf]
      %v374 = vld [vmem:[%s1 + $0x8] sm:$0xf]
      %v375 = vld [vmem:[%s1 + $0xc] sm:$0xf]
      %v376 = vld [vmem:[%s2] sm:$0x1]
      %v378 = vperm.slane %v376, 0
      %v388 = vunpack.c.l.b16 %v364
      %v389 = vunpack.c.l.b16 %v365
      %v390 = vunpack.c.l.b16 %v366
      %v391 = vunpack.c.l.b16 %v367
      %v392 = vunpack.c.l.b16 %v368
      %v393 = vunpack.c.l.b16 %v369
      %v394 = vunpack.c.l.b16 %v370
      %v395 = vunpack.c.l.b16 %v371
      %v396 = vpack.c.b16 %v389, %v388
      %v397 = vpack.c.b16 %v391, %v390
      %v398 = vpack.c.b16 %v393, %v392
      %v399 = vpack.c.b16 %v395, %v394
      %v404 = vunpack.c.l.b16 %v372
      %v405 = vunpack.c.l.b16 %v373
      %v406 = vunpack.c.l.b16 %v374
      %v407 = vunpack.c.l.b16 %v375
      %v408 = vpack.c.b16 %v405, %v404
      %v409 = vpack.c.b16 %v407, %v406
      %vm412 = vcmask 261120
      %v414 = vsel %vm412, %v396, 0
      %v417 = vsel %vm412, %v397, 0
      %v420 = vsel %vm412, %v398, 0
      %v423 = vsel %vm412, %v399, 0
      %425 = vmatpush.bf16.msra.mxu0 0
      %426 = vmatpush.bf16.msra.mxu0 0
      %427 = vmatpush.bf16.msra.mxu0 0
      %428 = vmatpush.bf16.msra.mxu0 0
      %429 = vmatpush.bf16.msra.mxu0 0
      %430 = vmatpush.bf16.msra.mxu0 0
      %431 = vmatpush.bf16.msra.mxu0 %v409
      %432 = vmatpush.bf16.msra.mxu0 %v408
      %433 = vmatmul.bf16.gmra.mxu0 %v414
      %v434 = vpop.f32.mrf.mxu0
      %v435 = vadd.f32 %v378, %v434
      %v436 = vpop.f32.mrf.mxu0
      %v437 = vadd.f32 %v378, %v436
      %438 = vmatmul.bf16.gmra.mxu0 %v417
      %v439 = vpop.f32.mrf.mxu0
      %v440 = vadd.f32 %v378, %v439
      %v441 = vpop.f32.mrf.mxu0
      %v442 = vadd.f32 %v378, %v441
      %443 = vmatmul.bf16.gmra.mxu0 %v420
      %v444 = vpop.f32.mrf.mxu0
      %v445 = vadd.f32 %v378, %v444
      %v446 = vpop.f32.mrf.mxu0
      %v447 = vadd.f32 %v378, %v446
      %448 = vmatmul.bf16.gmra.mxu0 %v423
      %v449 = vpop.f32.mrf.mxu0
      %v450 = vadd.f32 %v378, %v449
      %v451 = vpop.f32.mrf.mxu0
      %v452 = vadd.f32 %v378, %v451
      %453 = vdwg.mxu0
      %v454 = vpack.c.bf16 %v435, %v435
      %v455 = vpack.c.bf16 %v437, %v437
      %v456 = vpack.c.bf16 %v440, %v440
      %v457 = vpack.c.bf16 %v442, %v442
      %v458 = vpack.c.bf16 %v445, %v445
      %v459 = vpack.c.bf16 %v447, %v447
      %v460 = vpack.c.bf16 %v450, %v450
      %v461 = vpack.c.bf16 %v452, %v452
      %vm462 = vcmask 257024
      %463 = vst.msk [vmem:[%s349] sm:$0xf] %vm462, %v454
      %464 = vst.msk [vmem:[%s349 + $0x4] sm:$0xf] %vm462, %v455
      %465 = vst.msk [vmem:[%s349 + $0x8] sm:$0xf] %vm462, %v456
      %466 = vst.msk [vmem:[%s349 + $0xc] sm:$0xf] %vm462, %v457
      %467 = vst.msk [vmem:[%s349 + $0x10] sm:$0xf] %vm462, %v458
      %468 = vst.msk [vmem:[%s349 + $0x14] sm:$0xf] %vm462, %v459
      %469 = vst.msk [vmem:[%s349 + $0x18] sm:$0xf] %vm462, %v460
      %470 = vst.msk [vmem:[%s349 + $0x1c] sm:$0xf] %vm462, %v461
      %v471 = vld [vmem:[%s3] sm:$0xf]
      %v472 = vld [vmem:[%s3 + $0x4] sm:$0xf]
      %v473 = vld [vmem:[%s3 + $0x8] sm:$0xf]
      %v474 = vld [vmem:[%s3 + $0xc] sm:$0xf]
      %v475 = vld [vmem:[%s4] sm:$0x1]
      %v477 = vperm.slane %v475, 0
      %v483 = vunpack.c.l.b16 %v471
      %v484 = vunpack.c.l.b16 %v472
      %v485 = vunpack.c.l.b16 %v473
      %v486 = vunpack.c.l.b16 %v474
      %v487 = vpack.c.b16 %v484, %v483
      %v488 = vpack.c.b16 %v486, %v485
      %491 = vmatpush.bf16.msra.mxu0 0
      %492 = vmatpush.bf16.msra.mxu0 0
      %493 = vmatpush.bf16.msra.mxu0 0
      %494 = vmatpush.bf16.msra.mxu0 0
      %495 = vmatpush.bf16.msra.mxu0 0
      %496 = vmatpush.bf16.msra.mxu0 0
      %497 = vmatpush.bf16.msra.mxu0 %v488
      %498 = vmatpush.bf16.msra.mxu0 %v487
      %499 = vmatmul.bf16.gmra.mxu0 %v414
      %v500 = vpop.f32.mrf.mxu0
      %v501 = vadd.f32 %v477, %v500
      %v502 = vpop.f32.mrf.mxu0
      %v503 = vadd.f32 %v477, %v502
      %504 = vmatmul.bf16.gmra.mxu0 %v417
      %v505 = vpop.f32.mrf.mxu0
      %v506 = vadd.f32 %v477, %v505
      %v507 = vpop.f32.mrf.mxu0
      %v508 = vadd.f32 %v477, %v507
      %509 = vmatmul.bf16.gmra.mxu0 %v420
      %v510 = vpop.f32.mrf.mxu0
      %v511 = vadd.f32 %v477, %v510
      %v512 = vpop.f32.mrf.mxu0
      %v513 = vadd.f32 %v477, %v512
      %514 = vmatmul.bf16.gmra.mxu0 %v423
      %v515 = vpop.f32.mrf.mxu0
      %v516 = vadd.f32 %v477, %v515
      %v517 = vpop.f32.mrf.mxu0
      %v518 = vadd.f32 %v477, %v517
      %519 = vdwg.mxu0
      %v520 = vpack.c.bf16 %v501, %v501
      %v521 = vpack.c.bf16 %v503, %v503
      %v522 = vpack.c.bf16 %v506, %v506
      %v523 = vpack.c.bf16 %v508, %v508
      %v524 = vpack.c.bf16 %v511, %v511
      %v525 = vpack.c.bf16 %v513, %v513
      %v526 = vpack.c.bf16 %v516, %v516
      %v527 = vpack.c.bf16 %v518, %v518
      %528 = vst.msk [vmem:[%s355] sm:$0xf] %vm462, %v520
      %529 = vst.msk [vmem:[%s355 + $0x4] sm:$0xf] %vm462, %v521
      %530 = vst.msk [vmem:[%s355 + $0x8] sm:$0xf] %vm462, %v522
      %531 = vst.msk [vmem:[%s355 + $0xc] sm:$0xf] %vm462, %v523
      %532 = vst.msk [vmem:[%s355 + $0x10] sm:$0xf] %vm462, %v524
      %533 = vst.msk [vmem:[%s355 + $0x14] sm:$0xf] %vm462, %v525
      %534 = vst.msk [vmem:[%s355 + $0x18] sm:$0xf] %vm462, %v526
      %535 = vst.msk [vmem:[%s355 + $0x1c] sm:$0xf] %vm462, %v527
      %v536 = vld [vmem:[%s5] sm:$0xf]
      %v537 = vld [vmem:[%s5 + $0x4] sm:$0xf]
      %v538 = vld [vmem:[%s5 + $0x8] sm:$0xf]
      %v539 = vld [vmem:[%s5 + $0xc] sm:$0xf]
      %v540 = vld [vmem:[%s6] sm:$0x1]
      %v542 = vperm.slane %v540, 0
      %v548 = vunpack.c.l.b16 %v536
      %v549 = vunpack.c.l.b16 %v537
      %v550 = vunpack.c.l.b16 %v538
      %v551 = vunpack.c.l.b16 %v539
      %v552 = vpack.c.b16 %v549, %v548
      %v553 = vpack.c.b16 %v551, %v550
      %556 = vmatpush.bf16.msra.mxu0 0
      %557 = vmatpush.bf16.msra.mxu0 0
      %558 = vmatpush.bf16.msra.mxu0 0
      %559 = vmatpush.bf16.msra.mxu0 0
      %560 = vmatpush.bf16.msra.mxu0 0
      %561 = vmatpush.bf16.msra.mxu0 0
      %562 = vmatpush.bf16.msra.mxu0 %v553
      %563 = vmatpush.bf16.msra.mxu0 %v552
      %564 = vmatmul.bf16.gmra.mxu0 %v414
      %v565 = vpop.f32.mrf.mxu0
      %v566 = vadd.f32 %v542, %v565
      %v567 = vpop.f32.mrf.mxu0
      %v568 = vadd.f32 %v542, %v567
      %569 = vmatmul.bf16.gmra.mxu0 %v417
      %v570 = vpop.f32.mrf.mxu0
      %v571 = vadd.f32 %v542, %v570
      %v572 = vpop.f32.mrf.mxu0
      %v573 = vadd.f32 %v542, %v572
      %574 = vmatmul.bf16.gmra.mxu0 %v420
      %v575 = vpop.f32.mrf.mxu0
      %v576 = vadd.f32 %v542, %v575
      %v577 = vpop.f32.mrf.mxu0
      %v578 = vadd.f32 %v542, %v577
      %579 = vmatmul.bf16.gmra.mxu0 %v423
      %v580 = vpop.f32.mrf.mxu0
      %v581 = vadd.f32 %v542, %v580
      %v582 = vpop.f32.mrf.mxu0
      %v583 = vadd.f32 %v542, %v582
      %584 = vdwg.mxu0
      %v585 = vpack.c.bf16 %v566, %v566
      %v586 = vpack.c.bf16 %v568, %v568
      %v587 = vpack.c.bf16 %v571, %v571
      %v588 = vpack.c.bf16 %v573, %v573
      %v589 = vpack.c.bf16 %v576, %v576
      %v590 = vpack.c.bf16 %v578, %v578
      %v591 = vpack.c.bf16 %v581, %v581
      %v592 = vpack.c.bf16 %v583, %v583
      %593 = vst.msk [vmem:[%s361] sm:$0xf] %vm462, %v585
      %594 = vst.msk [vmem:[%s361 + $0x4] sm:$0xf] %vm462, %v586
      %595 = vst.msk [vmem:[%s361 + $0x8] sm:$0xf] %vm462, %v587
      %596 = vst.msk [vmem:[%s361 + $0xc] sm:$0xf] %vm462, %v588
      %597 = vst.msk [vmem:[%s361 + $0x10] sm:$0xf] %vm462, %v589
      %598 = vst.msk [vmem:[%s361 + $0x14] sm:$0xf] %vm462, %v590
      %599 = vst.msk [vmem:[%s361 + $0x18] sm:$0xf] %vm462, %v591
      %600 = vst.msk [vmem:[%s361 + $0x1c] sm:$0xf] %vm462, %v592
      %s601 = smul.u32 8, %s21
      %p602 = scmp.lt.s32.totalorder %s601, 15
      %s603 = scalar_select %p602, %s601, 15
      %s604 = smul.addr %s603, 4
      %s605 = scalar_lea.vmem %s7, %s604
      %s606 = smul.u32 8, %s21
      %p607 = scmp.lt.s32.totalorder %s606, 15
      %s608 = scalar_select %p607, %s606, 15
      %s609 = smul.addr %s608, 4
      %s610 = scalar_lea.vmem %s8, %s609
      %s611 = smul.u32 8, %s21
      %p612 = scmp.lt.s32.totalorder %s611, 15
      %s613 = scalar_select %p612, %s611, 15
      %s614 = smul.addr %s613, 4
      %s615 = scalar_lea.vmem %s9, %s614
      // Predicated region
      $region49: #{attention_forward.3} parent=47 // pred_check
        %p616 = pneg %p191
      $region50: #{attention_forward.3} parent=47 // pred_check_branch
        %618 = sbr.rel (%p616) target = $region52
      $region51: #{attention_forward.3} parent=47 // pred_region
        %s619 = smul.u32 8, %s21
      $region52: #{attention_forward.3} parent=47 // pred_fallthru
        _
      // Predicated region
      $region53: #{attention_forward.3} parent=47 // pred_check
        %p620 = pneg %p217
      $region54: #{attention_forward.3} parent=47 // pred_check_branch
        %622 = sbr.rel (%p620) target = $region56
      $region55: #{attention_forward.3} parent=47 // pred_region
        %s623 = smul.u32 8, %s21
      $region56: #{attention_forward.3} parent=47 // pred_fallthru
        _
      // Predicated region
      $region57: #{attention_forward.3} parent=47 // pred_check
        %p624 = pneg %p243
      $region58: #{attention_forward.3} parent=47 // pred_check_branch
        %626 = sbr.rel (%p624) target = $region60
      $region59: #{attention_forward.3} parent=47 // pred_region
        %s627 = smul.u32 8, %s21
      $region60: #{attention_forward.3} parent=47 // pred_fallthru
        _
    $region48: #{attention_forward.3} parent=5 // pred_fallthru
      _
    %p628 = scmp.le.s32.totalorder 2, %s16
    // Predicated region
    $region61: #{attention_forward.3} parent=5 // pred_check
      %p629 = pneg %p628
    $region62: #{attention_forward.3} parent=5 // pred_check_branch
      %631 = sbr.rel (%p629) target = $region64
    $region63: #{attention_forward.3} parent=5 // pred_region
      %s632 = ssub.s32 %s16, 2
      // Predicated region
      $region65: #{attention_forward.3} parent=63 // pred_check
        %p633 = pneg %p197
      $region66: #{attention_forward.3} parent=63 // pred_check_branch
        %635 = sbr.rel (%p633) target = $region68
      $region67: #{attention_forward.3} parent=63 // pred_region
        %s636 = smul.u32 8, %s22
        %p637 = scmp.lt.s32.totalorder %s636, 15
        %s638 = scalar_select %p637, %s636, 15
        %s639 = smul.addr %s638, 4
        %s640 = scalar_lea.vmem %s7, %s639
      $region68: #{attention_forward.3} parent=63 // pred_fallthru
        _
      // Predicated region
      $region69: #{attention_forward.3} parent=63 // pred_check
        %p641 = pneg %p223
      $region70: #{attention_forward.3} parent=63 // pred_check_branch
        %643 = sbr.rel (%p641) target = $region72
      $region71: #{attention_forward.3} parent=63 // pred_region
        %s644 = smul.u32 8, %s22
        %p645 = scmp.lt.s32.totalorder %s644, 15
        %s646 = scalar_select %p645, %s644, 15
        %s647 = smul.addr %s646, 4
        %s648 = scalar_lea.vmem %s8, %s647
      $region72: #{attention_forward.3} parent=63 // pred_fallthru
        _
      // Predicated region
      $region73: #{attention_forward.3} parent=63 // pred_check
        %p649 = pneg %p249
      $region74: #{attention_forward.3} parent=63 // pred_check_branch
        %651 = sbr.rel (%p649) target = $region76
      $region75: #{attention_forward.3} parent=63 // pred_region
        %s652 = smul.u32 8, %s22
        %p653 = scmp.lt.s32.totalorder %s652, 15
        %s654 = scalar_select %p653, %s652, 15
        %s655 = smul.addr %s654, 4
        %s656 = scalar_lea.vmem %s9, %s655
      $region76: #{attention_forward.3} parent=63 // pred_fallthru
        _
    $region64: #{attention_forward.3} parent=5 // pred_fallthru
      _
  $region6: #{attention_forward.3} parent=0 // loop_footer
    %s20 = sadd.s32 1, %s16
  $region7: #{attention_forward.3} parent=0 // loop_footer_branch
    %15 = sbr.rel target = $region3
  $region8: #{attention_forward.3} parent=0 // loop_exit
    _

// kernel: attention_forward.4
$region0: #{attention_forward.4}
  #allocation0 [shape = 'u32[]', space=smem, size = 0x4, offset = 0x4, fixed_abs, tag = 'smem constant byte address 0x4 - core index']
  #allocation1 [shape = 'u32[72,128]{1,0:T(1,128)}', space=vmem, size = 0x9000, scoped, tag = 'internal scratch']
  #allocation2 [shape = 'f32[4,32,1]{2,1,0:T(8,128)}', space=vmem, size = 0x10000, scoped, tag = 'scratch operand']
  #allocation3 [shape = 'f32[4,32,1]{2,1,0:T(8,128)}', space=vmem, size = 0x10000, scoped, tag = 'scratch operand']
  #allocation4 [shape = 'f32[4,32,8]{2,1,0:T(8,128)}', space=vmem, size = 0x10000, scoped, tag = 'scratch operand']
  %s0 = inlined_call_operand.vmem [shape: bf16[2,64,32], index: 0, kind: input, shape index: {}]
  %s1 = inlined_call_operand.vmem [shape: bf16[2,64,32], index: 1, kind: input, shape index: {}]
  %s2 = inlined_call_operand.vmem [shape: bf16[2,64,32], index: 2, kind: input, shape index: {}]
  %s3 = inlined_call_operand.vmem [shape: bf16[2,64,32], index: 3, kind: output, shape index: {}]
  %s4 = sld [smem:[#allocation0]]
  $region53: #{attention_forward.4} parent=0
    _
  %s6 = ssub.s32 1, %s4
  %s7 = scalar_select 0, %s6, %s4
  loop: start=0, step=1, limit=10
  $region2: #{attention_forward.4} parent=0 // loop_pre_header
    _
  $region3: #{attention_forward.4} parent=0 // loop_header
    %s9 = sphi 0, %s13
    %p10 = scmp.ge.s32.totalorder %s9, 10
    %s16 = sphi 0, %s42
    %s17 = sphi 0, %s38
    %s18 = sphi 0, %s34
    %s19 = sphi 0, %s30
    %s20 = sphi 0, %s16
    %s21 = sphi 0, %s17
    %s22 = sphi 0, %s18
    %s23 = sphi 0, %s19
    %s24 = sphi 0, %s20
    %s25 = sphi 0, %s21
    %s26 = sphi 0, %s22
    %s27 = sphi 0, %s23
    %s49 = sphi 0, %s51
    %s52 = sphi 0, %s49
    %s53 = sphi 0, %s52
    %s69 = sphi 0, %s53
    %s79 = sphi 0, %s81
    %s82 = sphi 0, %s79
    %s83 = sphi 0, %s82
    %s99 = sphi 0, %s83
    %s109 = sphi 0, %s111
    %s112 = sphi 0, %s109
    %s113 = sphi 0, %s112
    %s129 = sphi 0, %s113
    %s139 = sphi 0, %s141
    %s142 = sphi 0, %s139
    %s143 = sphi 0, %s142
    %s159 = sphi 0, %s143
  $region4: #{attention_forward.4} parent=0 // loop_header_branch
    %12 = sbr.rel (%p10) target = $region8
  $region5: #{attention_forward.4} parent=0 // loop_body
    %s14 = ssub.s32 %s9, 1
    %s15 = ssub.s32 %s9, 2
    %s28 = sadd.s32 1, %s19
    %p29 = scmp.ge.s32.totalorder %s28, 2
    %s30 = scalar_select %p29, 0, %s28
    %s31 = sadd.s32 1, %s18
    %s32 = scalar_select %p29, %s31, %s18
    %p33 = scmp.ge.s32.totalorder %s32, 2
    %s34 = scalar_select %p33, 0, %s32
    %s35 = sadd.s32 1, %s17
    %s36 = scalar_select %p33, %s35, %s17
    %p37 = scmp.ge.s32.totalorder %s36, 1
    %s38 = scalar_select %p37, 0, %s36
    %s39 = sadd.s32 1, %s16
    %s40 = scalar_select %p37, %s39, %s16
    %p41 = scmp.ge.s32.totalorder %s40, 2
    %s42 = scalar_select %p41, 0, %s40
    %s43 = ssub.s32 %s16, %s42
    %s44 = ssub.s32 %s18, %s34
    %s45 = sor.u32 %s43, %s44
    %s46 = ssub.s32 %s17, %s38
    %s47 = sor.u32 %s45, %s46
    %p48 = scmp.eq.s32.totalorder %s47, 0
    %s50 = sadd.s32 %s49, 1
    %s51 = scalar_select %p48, %s49, %s50
    %p54 = pneg %p48
    %p55 = scmp.eq.s32.totalorder %s9, 7
    %p56 = por %p54, %p55
    %p57 = scmp.ne.s32.totalorder %s49, %s52
    %p58 = scmp.eq.s32.totalorder %s9, 0
    %p59 = por %p57, %p58
    %p60 = scmp.ne.s32.totalorder %s49, %s52
    %p61 = scmp.eq.s32.totalorder %s14, 7
    %p62 = por %p60, %p61
    %p63 = scmp.ne.s32.totalorder %s52, %s53
    %p64 = scmp.eq.s32.totalorder %s14, 0
    %p65 = por %p63, %p64
    %p66 = scmp.ne.s32.totalorder %s52, %s53
    %p67 = scmp.eq.s32.totalorder %s15, 7
    %p68 = por %p66, %p67
    %p70 = scmp.ne.s32.totalorder %s53, %s69
    %p71 = scmp.eq.s32.totalorder %s15, 0
    %p72 = por %p70, %p71
    %s73 = ssub.s32 %s16, %s42
    %s74 = ssub.s32 %s19, %s30
    %s75 = sor.u32 %s73, %s74
    %s76 = ssub.s32 %s17, %s38
    %s77 = sor.u32 %s75, %s76
    %p78 = scmp.eq.s32.totalorder %s77, 0
    %s80 = sadd.s32 %s79, 1
    %s81 = scalar_select %p78, %s79, %s80
    %p84 = pneg %p78
    %p85 = scmp.eq.s32.totalorder %s9, 7
    %p86 = por %p84, %p85
    %p87 = scmp.ne.s32.totalorder %s79, %s82
    %p88 = scmp.eq.s32.totalorder %s9, 0
    %p89 = por %p87, %p88
    %p90 = scmp.ne.s32.totalorder %s79, %s82
    %p91 = scmp.eq.s32.totalorder %s14, 7
    %p92 = por %p90, %p91
    %p93 = scmp.ne.s32.totalorder %s82, %s83
    %p94 = scmp.eq.s32.totalorder %s14, 0
    %p95 = por %p93, %p94
    %p96 = scmp.ne.s32.totalorder %s82, %s83
    %p97 = scmp.eq.s32.totalorder %s15, 7
    %p98 = por %p96, %p97
    %p100 = scmp.ne.s32.totalorder %s83, %s99
    %p101 = scmp.eq.s32.totalorder %s15, 0
    %p102 = por %p100, %p101
    %s103 = ssub.s32 %s16, %s42
    %s104 = ssub.s32 %s19, %s30
    %s105 = sor.u32 %s103, %s104
    %s106 = ssub.s32 %s17, %s38
    %s107 = sor.u32 %s105, %s106
    %p108 = scmp.eq.s32.totalorder %s107, 0
    %s110 = sadd.s32 %s109, 1
    %s111 = scalar_select %p108, %s109, %s110
    %p114 = pneg %p108
    %p115 = scmp.eq.s32.totalorder %s9, 7
    %p116 = por %p114, %p115
    %p117 = scmp.ne.s32.totalorder %s109, %s112
    %p118 = scmp.eq.s32.totalorder %s9, 0
    %p119 = por %p117, %p118
    %p120 = scmp.ne.s32.totalorder %s109, %s112
    %p121 = scmp.eq.s32.totalorder %s14, 7
    %p122 = por %p120, %p121
    %p123 = scmp.ne.s32.totalorder %s112, %s113
    %p124 = scmp.eq.s32.totalorder %s14, 0
    %p125 = por %p123, %p124
    %p126 = scmp.ne.s32.totalorder %s112, %s113
    %p127 = scmp.eq.s32.totalorder %s15, 7
    %p128 = por %p126, %p127
    %p130 = scmp.ne.s32.totalorder %s113, %s129
    %p131 = scmp.eq.s32.totalorder %s15, 0
    %p132 = por %p130, %p131
    %s133 = ssub.s32 %s16, %s42
    %s134 = ssub.s32 %s18, %s34
    %s135 = sor.u32 %s133, %s134
    %s136 = ssub.s32 %s17, %s38
    %s137 = sor.u32 %s135, %s136
    %p138 = scmp.eq.s32.totalorder %s137, 0
    %s140 = sadd.s32 %s139, 1
    %s141 = scalar_select %p138, %s139, %s140
    %p144 = pneg %p138
    %p145 = scmp.eq.s32.totalorder %s9, 7
    %p146 = por %p144, %p145
    %p147 = scmp.ne.s32.totalorder %s139, %s142
    %p148 = scmp.eq.s32.totalorder %s9, 0
    %p149 = por %p147, %p148
    %p150 = scmp.ne.s32.totalorder %s139, %s142
    %p151 = scmp.eq.s32.totalorder %s14, 7
    %p152 = por %p150, %p151
    %p153 = scmp.ne.s32.totalorder %s142, %s143
    %p154 = scmp.eq.s32.totalorder %s14, 0
    %p155 = por %p153, %p154
    %p156 = scmp.ne.s32.totalorder %s142, %s143
    %p157 = scmp.eq.s32.totalorder %s15, 7
    %p158 = por %p156, %p157
    %p160 = scmp.ne.s32.totalorder %s143, %s159
    %p161 = scmp.eq.s32.totalorder %s15, 0
    %p162 = por %p160, %p161
    %p163 = scmp.le.s32.totalorder 1, %s9
    %p164 = scmp.lt.s32.totalorder %s9, 9
    %p165 = pnand %p163, %p164
    %p166 = pneg %p165
    // Predicated region
    $region9: #{attention_forward.4} parent=5 // pred_check
      _
    $region10: #{attention_forward.4} parent=5 // pred_check_branch
      %168 = sbr.rel (%p165) target = $region12
    $region11: #{attention_forward.4} parent=5 // pred_region
      %s169 = ssub.s32 %s9, 1
    $region12: #{attention_forward.4} parent=5 // pred_fallthru
      _
    %p170 = scmp.lt.s32.totalorder %s9, 8
    // Predicated region
    $region13: #{attention_forward.4} parent=5 // pred_check
      %p171 = pneg %p170
    $region14: #{attention_forward.4} parent=5 // pred_check_branch
      %173 = sbr.rel (%p171) target = $region16
    $region15: #{attention_forward.4} parent=5 // pred_region
      // Predicated region
      $region17: #{attention_forward.4} parent=15 // pred_check
        %p174 = pneg %p59
      $region18: #{attention_forward.4} parent=15 // pred_check_branch
        %176 = sbr.rel (%p174) target = $region20
      $region19: #{attention_forward.4} parent=15 // pred_region
        %s177 = smul.u32 4, %s18
        %p178 = scmp.lt.s32.totalorder %s16, 1
        %s179 = scalar_select %p178, %s16, 1
        %p180 = scmp.lt.s32.totalorder %s177, 7
        %s181 = scalar_select %p180, %s177, 7
        %p182 = scmp.lt.s32.totalorder %s17, 0
        %s183 = scalar_select %p182, %s17, 0
        %s184 = sadd.s32 %s183, %s181
        %s185 = smul.addr %s179, 8
        %s186 = sadd.s32 %s184, %s185
        %s187 = smul.addr %s186, 4
        %s188 = scalar_lea.vmem %s0, %s187
        %s189 = smul.u32 4, %s18
      $region20: #{attention_forward.4} parent=15 // pred_fallthru
        _
      // Predicated region
      $region21: #{attention_forward.4} parent=15 // pred_check
        %p190 = pneg %p89
      $region22: #{attention_forward.4} parent=15 // pred_check_branch
        %192 = sbr.rel (%p190) target = $region24
      $region23: #{attention_forward.4} parent=15 // pred_region
        %s193 = smul.u32 4, %s19
        %p194 = scmp.lt.s32.totalorder %s16, 1
        %s195 = scalar_select %p194, %s16, 1
        %p196 = scmp.lt.s32.totalorder %s193, 7
        %s197 = scalar_select %p196, %s193, 7
        %p198 = scmp.lt.s32.totalorder %s17, 0
        %s199 = scalar_select %p198, %s17, 0
        %s200 = sadd.s32 %s199, %s197
        %s201 = smul.addr %s195, 8
        %s202 = sadd.s32 %s200, %s201
        %s203 = smul.addr %s202, 4
        %s204 = scalar_lea.vmem %s1, %s203
        %s205 = smul.u32 4, %s19
      $region24: #{attention_forward.4} parent=15 // pred_fallthru
        _
      // Predicated region
      $region25: #{attention_forward.4} parent=15 // pred_check
        %p206 = pneg %p119
      $region26: #{attention_forward.4} parent=15 // pred_check_branch
        %208 = sbr.rel (%p206) target = $region28
      $region27: #{attention_forward.4} parent=15 // pred_region
        %s209 = smul.u32 4, %s19
        %p210 = scmp.lt.s32.totalorder %s16, 1
        %s211 = scalar_select %p210, %s16, 1
        %p212 = scmp.lt.s32.totalorder %s209, 7
        %s213 = scalar_select %p212, %s209, 7
        %p214 = scmp.lt.s32.totalorder %s17, 0
        %s215 = scalar_select %p214, %s17, 0
        %s216 = sadd.s32 %s215, %s213
        %s217 = smul.addr %s211, 8
        %s218 = sadd.s32 %s216, %s217
        %s219 = smul.addr %s218, 4
        %s220 = scalar_lea.vmem %s2, %s219
        %s221 = smul.u32 4, %s19
      $region28: #{attention_forward.4} parent=15 // pred_fallthru
        _
    $region16: #{attention_forward.4} parent=5 // pred_fallthru
      _
    %p222 = scmp.le.s32.totalorder 1, %s9
    %p223 = scmp.lt.s32.totalorder %s9, 9
    %p224 = pnand %p222, %p223
    %p225 = pneg %p224
    // Predicated region
    $region29: #{attention_forward.4} parent=5 // pred_check
      _
    $region30: #{attention_forward.4} parent=5 // pred_check_branch
      %227 = sbr.rel (%p224) target = $region32
    $region31: #{attention_forward.4} parent=5 // pred_region
      %s228 = ssub.s32 %s9, 1
      %s229 = smul.u32 4, %s22
      %p230 = scmp.lt.s32.totalorder %s20, 1
      %s231 = scalar_select %p230, %s20, 1
      %p232 = scmp.lt.s32.totalorder %s229, 7
      %s233 = scalar_select %p232, %s229, 7
      %p234 = scmp.lt.s32.totalorder %s21, 0
      %s235 = scalar_select %p234, %s21, 0
      %s236 = sadd.s32 %s235, %s233
      %s237 = smul.addr %s231, 8
      %s238 = sadd.s32 %s236, %s237
      %s239 = smul.addr %s238, 4
      %s240 = scalar_lea.vmem %s0, %s239
      %p241 = pneg %p65
      %p242 = pneg %p62
      %s243 = smul.u32 4, %s23
      %p244 = scmp.lt.s32.totalorder %s20, 1
      %s245 = scalar_select %p244, %s20, 1
      %p246 = scmp.lt.s32.totalorder %s243, 7
      %s247 = scalar_select %p246, %s243, 7
      %p248 = scmp.lt.s32.totalorder %s21, 0
      %s249 = scalar_select %p248, %s21, 0
      %s250 = sadd.s32 %s249, %s247
      %s251 = smul.addr %s245, 8
      %s252 = sadd.s32 %s250, %s251
      %s253 = smul.addr %s252, 4
      %s254 = scalar_lea.vmem %s1, %s253
      %p255 = pneg %p95
      %p256 = pneg %p92
      %s257 = smul.u32 4, %s23
      %p258 = scmp.lt.s32.totalorder %s20, 1
      %s259 = scalar_select %p258, %s20, 1
      %p260 = scmp.lt.s32.totalorder %s257, 7
      %s261 = scalar_select %p260, %s257, 7
      %p262 = scmp.lt.s32.totalorder %s21, 0
      %s263 = scalar_select %p262, %s21, 0
      %s264 = sadd.s32 %s263, %s261
      %s265 = smul.addr %s259, 8
      %s266 = sadd.s32 %s264, %s265
      %s267 = smul.addr %s266, 4
      %s268 = scalar_lea.vmem %s2, %s267
      %p269 = pneg %p125
      %p270 = pneg %p122
      %p271 = pneg %p155
      %p272 = pneg %p152
      %s273 = smul.u32 4, %s22
      %p274 = scmp.lt.s32.totalorder %s20, 1
      %s275 = scalar_select %p274, %s20, 1
      %p276 = scmp.lt.s32.totalorder %s273, 7
      %s277 = scalar_select %p276, %s273, 7
      %p278 = scmp.lt.s32.totalorder %s21, 0
      %s279 = scalar_select %p278, %s21, 0
      %s280 = sadd.s32 %s279, %s277
      %s281 = smul.addr %s275, 8
      %s282 = sadd.s32 %s280, %s281
      %s283 = smul.addr %s282, 4
      %s284 = scalar_lea.vmem %s3, %s283
      %s285 = smul.u32 4, %s22
      %p286 = scmp.lt.s32.totalorder %s20, 1
      %s287 = scalar_select %p286, %s20, 1
      %p288 = scmp.lt.s32.totalorder %s285, 7
      %s289 = scalar_select %p288, %s285, 7
      %p290 = scmp.lt.s32.totalorder %s21, 0
      %s291 = scalar_select %p290, %s21, 0
      %s292 = sadd.s32 %s291, %s289
      %s293 = smul.addr %s287, 8
      %s294 = sadd.s32 %s292, %s293
      %s295 = smul.addr %s294, 4
      %s296 = scalar_lea.vmem %s0, %s295
      %s297 = smul.u32 4, %s22
      %s298 = smul.u32 4, %s23
      %p299 = scmp.lt.s32.totalorder %s20, 1
      %s300 = scalar_select %p299, %s20, 1
      %p301 = scmp.lt.s32.totalorder %s298, 7
      %s302 = scalar_select %p301, %s298, 7
      %p303 = scmp.lt.s32.totalorder %s21, 0
      %s304 = scalar_select %p303, %s21, 0
      %s305 = sadd.s32 %s304, %s302
      %s306 = smul.addr %s300, 8
      %s307 = sadd.s32 %s305, %s306
      %s308 = smul.addr %s307, 4
      %s309 = scalar_lea.vmem %s1, %s308
      %s310 = smul.u32 4, %s23
      %s311 = smul.u32 4, %s23
      %p312 = scmp.lt.s32.totalorder %s20, 1
      %s313 = scalar_select %p312, %s20, 1
      %p314 = scmp.lt.s32.totalorder %s311, 7
      %s315 = scalar_select %p314, %s311, 7
      %p316 = scmp.lt.s32.totalorder %s21, 0
      %s317 = scalar_select %p316, %s21, 0
      %s318 = sadd.s32 %s317, %s315
      %s319 = smul.addr %s313, 8
      %s320 = sadd.s32 %s318, %s319
      %s321 = smul.addr %s320, 4
      %s322 = scalar_lea.vmem %s2, %s321
      %s323 = smul.u32 4, %s23
      %s324 = smul.u32 4, %s22
      %p325 = scmp.lt.s32.totalorder %s20, 1
      %s326 = scalar_select %p325, %s20, 1
      %p327 = scmp.lt.s32.totalorder %s324, 7
      %s328 = scalar_select %p327, %s324, 7
      %p329 = scmp.lt.s32.totalorder %s21, 0
      %s330 = scalar_select %p329, %s21, 0
      %s331 = sadd.s32 %s330, %s328
      %s332 = smul.addr %s326, 8
      %s333 = sadd.s32 %s331, %s332
      %s334 = smul.addr %s333, 4
      %s335 = scalar_lea.vmem %s3, %s334
      %s336 = smul.u32 4, %s22
      %p338 = scmp.eq.s32.totalorder %s23, 0
      // Predicated region
      $region33: #{attention_forward.4} parent=31 // pred_check
        %p339 = pneg %p338
      $region34: #{attention_forward.4} parent=31 // pred_check_branch
        %341 = sbr.rel (%p339) target = $region36
      $region35: #{attention_forward.4} parent=31 // pred_region
        %vm342 = vcmask 7168
        %343 = vst.msk [vmem:[#allocation2] sm:$0xff] %vm342, -inf
        %344 = vst.msk [vmem:[#allocation2 + $0x8] sm:$0xff] %vm342, -inf
        %345 = vst.msk [vmem:[#allocation2 + $0x10] sm:$0xff] %vm342, -inf
        %346 = vst.msk [vmem:[#allocation2 + $0x18] sm:$0xff] %vm342, -inf
        %347 = vst.msk [vmem:[#allocation2 + $0x20] sm:$0xff] %vm342, -inf
        %348 = vst.msk [vmem:[#allocation2 + $0x28] sm:$0xff] %vm342, -inf
        %349 = vst.msk [vmem:[#allocation2 + $0x30] sm:$0xff] %vm342, -inf
        %350 = vst.msk [vmem:[#allocation2 + $0x38] sm:$0xff] %vm342, -inf
        %351 = vst.msk [vmem:[#allocation2 + $0x40] sm:$0xff] %vm342, -inf
        %352 = vst.msk [vmem:[#allocation2 + $0x48] sm:$0xff] %vm342, -inf
        %353 = vst.msk [vmem:[#allocation2 + $0x50] sm:$0xff] %vm342, -inf
        %354 = vst.msk [vmem:[#allocation2 + $0x58] sm:$0xff] %vm342, -inf
        %355 = vst.msk [vmem:[#allocation2 + $0x60] sm:$0xff] %vm342, -inf
        %356 = vst.msk [vmem:[#allocation2 + $0x68] sm:$0xff] %vm342, -inf
        %357 = vst.msk [vmem:[#allocation2 + $0x70] sm:$0xff] %vm342, -inf
        %358 = vst.msk [vmem:[#allocation2 + $0x78] sm:$0xff] %vm342, -inf
        %359 = vst.msk [vmem:[#allocation3] sm:$0xff] %vm342, 0.0
        %360 = vst.msk [vmem:[#allocation3 + $0x8] sm:$0xff] %vm342, 0.0
        %361 = vst.msk [vmem:[#allocation3 + $0x10] sm:$0xff] %vm342, 0.0
        %362 = vst.msk [vmem:[#allocation3 + $0x18] sm:$0xff] %vm342, 0.0
        %363 = vst.msk [vmem:[#allocation3 + $0x20] sm:$0xff] %vm342, 0.0
        %364 = vst.msk [vmem:[#allocation3 + $0x28] sm:$0xff] %vm342, 0.0
        %365 = vst.msk [vmem:[#allocation3 + $0x30] sm:$0xff] %vm342, 0.0
        %366 = vst.msk [vmem:[#allocation3 + $0x38] sm:$0xff] %vm342, 0.0
        %367 = vst.msk [vmem:[#allocation3 + $0x40] sm:$0xff] %vm342, 0.0
        %368 = vst.msk [vmem:[#allocation3 + $0x48] sm:$0xff] %vm342, 0.0
        %369 = vst.msk [vmem:[#allocation3 + $0x50] sm:$0xff] %vm342, 0.0
        %370 = vst.msk [vmem:[#allocation3 + $0x58] sm:$0xff] %vm342, 0.0
        %371 = vst.msk [vmem:[#allocation3 + $0x60] sm:$0xff] %vm342, 0.0
        %372 = vst.msk [vmem:[#allocation3 + $0x68] sm:$0xff] %vm342, 0.0
        %373 = vst.msk [vmem:[#allocation3 + $0x70] sm:$0xff] %vm342, 0.0
        %374 = vst.msk [vmem:[#allocation3 + $0x78] sm:$0xff] %vm342, 0.0
        %vm375 = vcmask 64512
        %376 = vst.msk [vmem:[#allocation4] sm:$0xff] %vm375, 0.0
        %377 = vst.msk [vmem:[#allocation4 + $0x8] sm:$0xff] %vm375, 0.0
        %378 = vst.msk [vmem:[#allocation4 + $0x10] sm:$0xff] %vm375, 0.0
        %379 = vst.msk [vmem:[#allocation4 + $0x18] sm:$0xff] %vm375, 0.0
        %380 = vst.msk [vmem:[#allocation4 + $0x20] sm:$0xff] %vm375, 0.0
        %381 = vst.msk [vmem:[#allocation4 + $0x28] sm:$0xff] %vm375, 0.0
        %382 = vst.msk [vmem:[#allocation4 + $0x30] sm:$0xff] %vm375, 0.0
        %383 = vst.msk [vmem:[#allocation4 + $0x38] sm:$0xff] %vm375, 0.0
        %384 = vst.msk [vmem:[#allocation4 + $0x40] sm:$0xff] %vm375, 0.0
        %385 = vst.msk [vmem:[#allocation4 + $0x48] sm:$0xff] %vm375, 0.0
        %386 = vst.msk [vmem:[#allocation4 + $0x50] sm:$0xff] %vm375, 0.0
        %387 = vst.msk [vmem:[#allocation4 + $0x58] sm:$0xff] %vm375, 0.0
        %388 = vst.msk [vmem:[#allocation4 + $0x60] sm:$0xff] %vm375, 0.0
        %389 = vst.msk [vmem:[#allocation4 + $0x68] sm:$0xff] %vm375, 0.0
        %390 = vst.msk [vmem:[#allocation4 + $0x70] sm:$0xff] %vm375, 0.0
        %391 = vst.msk [vmem:[#allocation4 + $0x78] sm:$0xff] %vm375, 0.0
      $region36: #{attention_forward.4} parent=31 // pred_fallthru
        _
      %v392 = vld [vmem:[%s296] sm:$0xf]
      %v393 = vld [vmem:[%s296 + $0x4] sm:$0xf]
      %v394 = vld [vmem:[%s296 + $0x8] sm:$0xf]
      %v395 = vld [vmem:[%s296 + $0xc] sm:$0xf]
      %v396 = vld [vmem:[%s309] sm:$0xf]
      %v397 = vld [vmem:[%s309 + $0x4] sm:$0xf]
      %v398 = vld [vmem:[%s309 + $0x8] sm:$0xf]
      %v399 = vld [vmem:[%s309 + $0xc] sm:$0xf]
      %v400 = vld [vmem:[%s322] sm:$0xf]
      %v401 = vld [vmem:[%s322 + $0x4] sm:$0xf]
      %v402 = vld [vmem:[%s322 + $0x8] sm:$0xf]
      %v403 = vld [vmem:[%s322 + $0xc] sm:$0xf]
      %v408 = vunpack.c.l.b16 %v392
      %v409 = vunpack.c.l.b16 %v393
      %v410 = vunpack.c.l.b16 %v394
      %v411 = vunpack.c.l.b16 %v395
      %v412 = vpack.c.b16 %v409, %v408
      %v413 = vpack.c.b16 %v411, %v410
      %v418 = vunpack.c.l.b16 %v396
      %v419 = vunpack.c.l.b16 %v397
      %v420 = vunpack.c.l.b16 %v398
      %v421 = vunpack.c.l.b16 %v399
      %v422 = vpack.c.b16 %v419, %v418
      %v423 = vpack.c.b16 %v421, %v420
      %vm424 = vcmask 64512
      %v426 = vsel %vm424, %v412, 0
      %v429 = vsel %vm424, %v413, 0
      %v432 = vsel %vm424, %v422, 0
      %v435 = vsel %vm424, %v423, 0
      %437 = vmatpush.bf16.xpose.msra.mxu0 0
      %438 = vmatpush.bf16.xpose.msra.mxu0 0
      %439 = vmatpush.bf16.xpose.msra.mxu0 0
      %440 = vmatpush.bf16.xpose.msra.mxu0 0
      %441 = vmatpush.bf16.xpose.msra.mxu0 0
      %442 = vmatpush.bf16.xpose.msra.mxu0 0
      %443 = vmatpush.bf16.xpose.msra.mxu0 %v435
      %444 = vmatpush.bf16.xpose.msra.mxu0 %v432
      %445 = vmatmul.bf16.gmra.mxu0 %v426
      %v446 = vpop.f32.mrf.mxu0
      %v447 = vadd.f32 0.0, %v446
      %v448 = vpop.f32.mrf.mxu0
      %v449 = vadd.f32 0.0, %v448
      %450 = vmatmul.bf16.gmra.mxu0 %v429
      %v451 = vpop.f32.mrf.mxu0
      %v452 = vadd.f32 0.0, %v451
      %v453 = vpop.f32.mrf.mxu0
      %v454 = vadd.f32 0.0, %v453
      %455 = vdwg.mxu0
      %v456 = vld [vmem:[#allocation2] sm:$0xff]
      %v457 = vld [vmem:[#allocation2 + $0x8] sm:$0xff]
      %v458 = vld [vmem:[#allocation2 + $0x10] sm:$0xff]
      %v459 = vld [vmem:[#allocation2 + $0x18] sm:$0xff]
      %vm460 = vcmask 261120
      %v461 = vsel %vm460, %v447, -inf
      %462 = vmax.xlane.f32.xlu0 %v461
      %v463 = vpop.xlane.xlu0 %462
      %v464 = vsel %vm460, %v449, -inf
      %465 = vmax.xlane.f32.xlu0 %v464
      %v466 = vpop.xlane.xlu0 %465
      %v467 = vsel %vm460, %v452, -inf
      %468 = vmax.xlane.f32.xlu0 %v467
      %v469 = vpop.xlane.xlu0 %468
      %v470 = vsel %vm460, %v454, -inf
      %471 = vmax.xlane.f32.xlu0 %v470
      %v472 = vpop.xlane.xlu0 %471
      %v473 = vmax.f32 %v456, %v463
      %v474 = vmax.f32 %v457, %v466
      %v475 = vmax.f32 %v458, %v469
      %v476 = vmax.f32 %v459, %v472
      %v477 = vsub.f32 %v456, %v473
      %v478 = vsub.f32 %v457, %v474
      %v479 = vsub.f32 %v458, %v475
      %v480 = vsub.f32 %v459, %v476
      %v481 = vpow.pop %v477
      %v482 = vpow.pop %v478
      %v483 = vpow.pop %v479
      %v484 = vpow.pop %v480
      %486 = vset.pattern.permute.xlu0 0
      %487 = vperm.xlu0 %486, %v473
      %v488 = vpop.permute.xlu0 %487
      %491 = vset.pattern.permute.xlu0 0
      %492 = vperm.xlu0 %491, %v474
      %v493 = vpop.permute.xlu0 %492
      %496 = vset.pattern.permute.xlu0 0
      %497 = vperm.xlu0 %496, %v475
      %v498 = vpop.permute.xlu0 %497
      %501 = vset.pattern.permute.xlu0 0
      %502 = vperm.xlu0 %501, %v476
      %v503 = vpop.permute.xlu0 %502
      %v505 = vsub.f32 %v447, %v488
      %v506 = vsub.f32 %v449, %v493
      %v507 = vsub.f32 %v452, %v498
      %v508 = vsub.f32 %v454, %v503
      %v509 = vpow.pop %v505
      %v510 = vpow.pop %v506
      %v511 = vpow.pop %v507
      %v512 = vpow.pop %v508
      %v513 = vld [vmem:[#allocation3] sm:$0xff]
      %v514 = vld [vmem:[#allocation3 + $0x8] sm:$0xff]
      %v515 = vld [vmem:[#allocation3 + $0x10] sm:$0xff]
      %v516 = vld [vmem:[#allocation3 + $0x18] sm:$0xff]
      %v517 = vmul.f32 %v481, %v513
      %v518 = vmul.f32 %v482, %v514
      %v519 = vmul.f32 %v483, %v515
      %v520 = vmul.f32 %v484, %v516
      %v521 = vsel %vm460, %v509, 0.0
      %522 = vadd.xlane.f32.xlu0 %v521
      %v523 = vpop.xlane.xlu0 %522
      %v524 = vsel %vm460, %v510, 0.0
      %525 = vadd.xlane.f32.xlu0 %v524
      %v526 = vpop.xlane.xlu0 %525
      %v527 = vsel %vm460, %v511, 0.0
      %528 = vadd.xlane.f32.xlu0 %v527
      %v529 = vpop.xlane.xlu0 %528
      %v530 = vsel %vm460, %v512, 0.0
      %531 = vadd.xlane.f32.xlu0 %v530
      %v532 = vpop.xlane.xlu0 %531
      %v533 = vadd.f32 %v517, %v523
      %v534 = vadd.f32 %v518, %v526
      %v535 = vadd.f32 %v519, %v529
      %v536 = vadd.f32 %v520, %v532
      %vm537 = vcmask 7168
      %538 = vst.msk [vmem:[#allocation3] sm:$0xff] %vm537, %v533
      %539 = vst.msk [vmem:[#allocation3 + $0x8] sm:$0xff] %vm537, %v534
      %540 = vst.msk [vmem:[#allocation3 + $0x10] sm:$0xff] %vm537, %v535
      %541 = vst.msk [vmem:[#allocation3 + $0x18] sm:$0xff] %vm537, %v536
      %v542 = vld [vmem:[#allocation4] sm:$0xff]
      %v543 = vld [vmem:[#allocation4 + $0x8] sm:$0xff]
      %v544 = vld [vmem:[#allocation4 + $0x10] sm:$0xff]
      %v545 = vld [vmem:[#allocation4 + $0x18] sm:$0xff]
      %547 = vset.pattern.permute.xlu0 0
      %548 = vperm.xlu0 %547, %v481
      %v549 = vpop.permute.xlu0 %548
      %552 = vset.pattern.permute.xlu0 0
      %553 = vperm.xlu0 %552, %v482
      %v554 = vpop.permute.xlu0 %553
      %557 = vset.pattern.permute.xlu0 0
      %558 = vperm.xlu0 %557, %v483
      %v559 = vpop.permute.xlu0 %558
      %562 = vset.pattern.permute.xlu0 0
      %563 = vperm.xlu0 %562, %v484
      %v564 = vpop.permute.xlu0 %563
      %v566 = vmul.f32 %v549, %v542
      %v567 = vmul.f32 %v554, %v543
      %v568 = vmul.f32 %v559, %v544
      %v569 = vmul.f32 %v564, %v545
      %v570 = vpack.c.bf16 %v510, %v509
      %v571 = vpack.c.bf16 %v512, %v511
      %v576 = vunpack.c.l.b16 %v400
      %v577 = vunpack.c.l.b16 %v401
      %v578 = vunpack.c.l.b16 %v402
      %v579 = vunpack.c.l.b16 %v403
      %v580 = vpack.c.b16 %v577, %v576
      %v581 = vpack.c.b16 %v579, %v578
      %v585 = vsel %vm460, %v570, 0
      %v588 = vsel %vm460, %v571, 0
      %590 = vmatpush.bf16.msra.mxu0 0
      %591 = vmatpush.bf16.msra.mxu0 0
      %592 = vmatpush.bf16.msra.mxu0 0
      %593 = vmatpush.bf16.msra.mxu0 0
      %594 = vmatpush.bf16.msra.mxu0 0
      %595 = vmatpush.bf16.msra.mxu0 0
      %596 = vmatpush.bf16.msra.mxu0 %v581
      %597 = vmatpush.bf16.msra.mxu0 %v580
      %598 = vmatmul.bf16.gmra.mxu0 %v585
      %v599 = vpop.f32.mrf.mxu0
      %v600 = vadd.f32 0.0, %v599
      %v601 = vpop.f32.mrf.mxu0
      %v602 = vadd.f32 0.0, %v601
      %603 = vmatmul.bf16.gmra.mxu0 %v588
      %v604 = vpop.f32.mrf.mxu0
      %v605 = vadd.f32 0.0, %v604
      %v606 = vpop.f32.mrf.mxu0
      %v607 = vadd.f32 0.0, %v606
      %608 = vdwg.mxu0
      %v609 = vadd.f32 %v566, %v600
      %v610 = vadd.f32 %v567, %v602
      %v611 = vadd.f32 %v568, %v605
      %v612 = vadd.f32 %v569, %v607
      %613 = vst.msk [vmem:[#allocation4] sm:$0xff] %vm424, %v609
      %614 = vst.msk [vmem:[#allocation4 + $0x8] sm:$0xff] %vm424, %v610
      %615 = vst.msk [vmem:[#allocation4 + $0x10] sm:$0xff] %vm424, %v611
      %616 = vst.msk [vmem:[#allocation4 + $0x18] sm:$0xff] %vm424, %v612
      %617 = vst.msk [vmem:[#allocation2] sm:$0xff] %vm537, %v473
      %618 = vst.msk [vmem:[#allocation2 + $0x8] sm:$0xff] %vm537, %v474
      %619 = vst.msk [vmem:[#allocation2 + $0x10] sm:$0xff] %vm537, %v475
      %620 = vst.msk [vmem:[#allocation2 + $0x18] sm:$0xff] %vm537, %v476
      %621 = vrot.lane.b32.xlu0 %v412, 120
      %v622 = vpop.permute.xlu0 %621
      %623 = vrot.lane.b32.xlu0 %v413, 120
      %v624 = vpop.permute.xlu0 %623
      %625 = vrot.lane.b32.xlu0 %v422, 120
      %v626 = vpop.permute.xlu0 %625
      %627 = vrot.lane.b32.xlu0 %v423, 120
      %v628 = vpop.permute.xlu0 %627
      %v630 = vsel %vm424, %v622, 0
      %v633 = vsel %vm424, %v624, 0
      %v636 = vsel %vm424, %v626, 0
      %v639 = vsel %vm424, %v628, 0
      %641 = vmatpush.bf16.xpose.msra.mxu0 0
      %642 = vmatpush.bf16.xpose.msra.mxu0 0
      %643 = vmatpush.bf16.xpose.msra.mxu0 0
      %644 = vmatpush.bf16.xpose.msra.mxu0 0
      %645 = vmatpush.bf16.xpose.msra.mxu0 0
      %646 = vmatpush.bf16.xpose.msra.mxu0 0
      %647 = vmatpush.bf16.xpose.msra.mxu0 %v639
      %648 = vmatpush.bf16.xpose.msra.mxu0 %v636
      %649 = vmatmul.bf16.gmra.mxu0 %v630
      %v650 = vpop.f32.mrf.mxu0
      %v651 = vadd.f32 0.0, %v650
      %v652 = vpop.f32.mrf.mxu0
      %v653 = vadd.f32 0.0, %v652
      %654 = vmatmul.bf16.gmra.mxu0 %v633
      %v655 = vpop.f32.mrf.mxu0
      %v656 = vadd.f32 0.0, %v655
      %v657 = vpop.f32.mrf.mxu0
      %v658 = vadd.f32 0.0, %v657
      %659 = vdwg.mxu0
      %s660 = scalar_lea.vmem [#allocation2], 32
      %v661 = vld [vmem:[%s660] sm:$0xff]
      %v662 = vld [vmem:[%s660 + $0x8] sm:$0xff]
      %v663 = vld [vmem:[%s660 + $0x10] sm:$0xff]
      %v664 = vld [vmem:[%s660 + $0x18] sm:$0xff]
      %v665 = vsel %vm460, %v651, -inf
      %666 = vmax.xlane.f32.xlu0 %v665
      %v667 = vpop.xlane.xlu0 %666
      %v668 = vsel %vm460, %v653, -inf
      %669 = vmax.xlane.f32.xlu0 %v668
      %v670 = vpop.xlane.xlu0 %669
      %v671 = vsel %vm460, %v656, -inf
      %672 = vmax.xlane.f32.xlu0 %v671
      %v673 = vpop.xlane.xlu0 %672
      %v674 = vsel %vm460, %v658, -inf
      %675 = vmax.xlane.f32.xlu0 %v674
      %v676 = vpop.xlane.xlu0 %675
      %v677 = vmax.f32 %v661, %v667
      %v678 = vmax.f32 %v662, %v670
      %v679 = vmax.f32 %v663, %v673
      %v680 = vmax.f32 %v664, %v676
      %v681 = vsub.f32 %v661, %v677
      %v682 = vsub.f32 %v662, %v678
      %v683 = vsub.f32 %v663, %v679
      %v684 = vsub.f32 %v664, %v680
      %v685 = vpow.pop %v681
      %v686 = vpow.pop %v682
      %v687 = vpow.pop %v683
      %v688 = vpow.pop %v684
      %690 = vset.pattern.permute.xlu0 0
      %691 = vperm.xlu0 %690, %v677
      %v692 = vpop.permute.xlu0 %691
      %695 = vset.pattern.permute.xlu0 0
      %696 = vperm.xlu0 %695, %v678
      %v697 = vpop.permute.xlu0 %696
      %700 = vset.pattern.permute.xlu0 0
      %701 = vperm.xlu0 %700, %v679
      %v702 = vpop.permute.xlu0 %701
      %705 = vset.pattern.permute.xlu0 0
      %706 = vperm.xlu0 %705, %v680
      %v707 = vpop.permute.xlu0 %706
      %v709 = vsub.f32 %v651, %v692
      %v710 = vsub.f32 %v653, %v697
      %v711 = vsub.f32 %v656, %v702
      %v712 = vsub.f32 %v658, %v707
      %v713 = vpow.pop %v709
      %v714 = vpow.pop %v710
      %v715 = vpow.pop %v711
      %v716 = vpow.pop %v712
      %s717 = scalar_lea.vmem [#allocation3], 32
      %v718 = vld [vmem:[%s717] sm:$0xff]
      %v719 = vld [vmem:[%s717 + $0x8] sm:$0xff]
      %v720 = vld [vmem:[%s717 + $0x10] sm:$0xff]
      %v721 = vld [vmem:[%s717 + $0x18] sm:$0xff]
      %v722 = vmul.f32 %v685, %v718
      %v723 = vmul.f32 %v686, %v719
      %v724 = vmul.f32 %v687, %v720
      %v725 = vmul.f32 %v688, %v721
      %v726 = vsel %vm460, %v713, 0.0
      %727 = vadd.xlane.f32.xlu0 %v726
      %v728 = vpop.xlane.xlu0 %727
      %v729 = vsel %vm460, %v714, 0.0
      %730 = vadd.xlane.f32.xlu0 %v729
      %v731 = vpop.xlane.xlu0 %730
      %v732 = vsel %vm460, %v715, 0.0
      %733 = vadd.xlane.f32.xlu0 %v732
      %v734 = vpop.xlane.xlu0 %733
      %v735 = vsel %vm460, %v716, 0.0
      %736 = vadd.xlane.f32.xlu0 %v735
      %v737 = vpop.xlane.xlu0 %736
      %v738 = vadd.f32 %v722, %v728
      %v739 = vadd.f32 %v723, %v731
      %v740 = vadd.f32 %v724, %v734
      %v741 = vadd.f32 %v725, %v737
      %742 = vst.msk [vmem:[%s717] sm:$0xff] %vm537, %v738
      %743 = vst.msk [vmem:[%s717 + $0x8] sm:$0xff] %vm537, %v739
      %744 = vst.msk [vmem:[%s717 + $0x10] sm:$0xff] %vm537, %v740
      %745 = vst.msk [vmem:[%s717 + $0x18] sm:$0xff] %vm537, %v741
      %s746 = scalar_lea.vmem [#allocation4], 32
      %v747 = vld [vmem:[%s746] sm:$0xff]
      %v748 = vld [vmem:[%s746 + $0x8] sm:$0xff]
      %v749 = vld [vmem:[%s746 + $0x10] sm:$0xff]
      %v750 = vld [vmem:[%s746 + $0x18] sm:$0xff]
      %752 = vset.pattern.permute.xlu0 0
      %753 = vperm.xlu0 %752, %v685
      %v754 = vpop.permute.xlu0 %753
      %757 = vset.pattern.permute.xlu0 0
      %758 = vperm.xlu0 %757, %v686
      %v759 = vpop.permute.xlu0 %758
      %762 = vset.pattern.permute.xlu0 0
      %763 = vperm.xlu0 %762, %v687
      %v764 = vpop.permute.xlu0 %763
      %767 = vset.pattern.permute.xlu0 0
      %768 = vperm.xlu0 %767, %v688
      %v769 = vpop.permute.xlu0 %768
      %v771 = vmul.f32 %v754, %v747
      %v772 = vmul.f32 %v759, %v748
      %v773 = vmul.f32 %v764, %v749
      %v774 = vmul.f32 %v769, %v750
      %v775 = vpack.c.bf16 %v714, %v713
      %v776 = vpack.c.bf16 %v716, %v715
      %777 = vrot.lane.b32.xlu0 %v580, 120
      %v778 = vpop.permute.xlu0 %777
      %779 = vrot.lane.b32.xlu0 %v581, 120
      %v780 = vpop.permute.xlu0 %779
      %v784 = vsel %vm460, %v775, 0
      %v787 = vsel %vm460, %v776, 0
      %789 = vmatpush.bf16.msra.mxu0 0
      %790 = vmatpush.bf16.msra.mxu0 0
      %791 = vmatpush.bf16.msra.mxu0 0
      %792 = vmatpush.bf16.msra.mxu0 0
      %793 = vmatpush.bf16.msra.mxu0 0
      %794 = vmatpush.bf16.msra.mxu0 0
      %795 = vmatpush.bf16.msra.mxu0 %v780
      %796 = vmatpush.bf16.msra.mxu0 %v778
      %797 = vmatmul.bf16.gmra.mxu0 %v784
      %v798 = vpop.f32.mrf.mxu0
      %v799 = vadd.f32 0.0, %v798
      %v800 = vpop.f32.mrf.mxu0
      %v801 = vadd.f32 0.0, %v800
      %802 = vmatmul.bf16.gmra.mxu0 %v787
      %v803 = vpop.f32.mrf.mxu0
      %v804 = vadd.f32 0.0, %v803
      %v805 = vpop.f32.mrf.mxu0
      %v806 = vadd.f32 0.0, %v805
      %807 = vdwg.mxu0
      %v808 = vadd.f32 %v771, %v799
      %v809 = vadd.f32 %v772, %v801
      %v810 = vadd.f32 %v773, %v804
      %v811 = vadd.f32 %v774, %v806
      %812 = vst.msk [vmem:[%s746] sm:$0xff] %vm424, %v808
      %813 = vst.msk [vmem:[%s746 + $0x8] sm:$0xff] %vm424, %v809
      %814 = vst.msk [vmem:[%s746 + $0x10] sm:$0xff] %vm424, %v810
      %815 = vst.msk [vmem:[%s746 + $0x18] sm:$0xff] %vm424, %v811
      %816 = vst.msk [vmem:[%s660] sm:$0xff] %vm537, %v677
      %817 = vst.msk [vmem:[%s660 + $0x8] sm:$0xff] %vm537, %v678
      %818 = vst.msk [vmem:[%s660 + $0x10] sm:$0xff] %vm537, %v679
      %819 = vst.msk [vmem:[%s660 + $0x18] sm:$0xff] %vm537, %v680
      %820 = vrot.lane.b32.xlu0 %v412, 112
      %v821 = vpop.permute.xlu0 %820
      %822 = vrot.lane.b32.xlu0 %v413, 112
      %v823 = vpop.permute.xlu0 %822
      %824 = vrot.lane.b32.xlu0 %v422, 112
      %v825 = vpop.permute.xlu0 %824
      %826 = vrot.lane.b32.xlu0 %v423, 112
      %v827 = vpop.permute.xlu0 %826
      %v829 = vsel %vm424, %v821, 0
      %v832 = vsel %vm424, %v823, 0
      %v835 = vsel %vm424, %v825, 0
      %v838 = vsel %vm424, %v827, 0
      %840 = vmatpush.bf16.xpose.msra.mxu0 0
      %841 = vmatpush.bf16.xpose.msra.mxu0 0
      %842 = vmatpush.bf16.xpose.msra.mxu0 0
      %843 = vmatpush.bf16.xpose.msra.mxu0 0
      %844 = vmatpush.bf16.xpose.msra.mxu0 0
      %845 = vmatpush.bf16.xpose.msra.mxu0 0
      %846 = vmatpush.bf16.xpose.msra.mxu0 %v838
      %847 = vmatpush.bf16.xpose.msra.mxu0 %v835
      %848 = vmatmul.bf16.gmra.mxu0 %v829
      %v849 = vpop.f32.mrf.mxu0
      %v850 = vadd.f32 0.0, %v849
      %v851 = vpop.f32.mrf.mxu0
      %v852 = vadd.f32 0.0, %v851
      %853 = vmatmul.bf16.gmra.mxu0 %v832
      %v854 = vpop.f32.mrf.mxu0
      %v855 = vadd.f32 0.0, %v854
      %v856 = vpop.f32.mrf.mxu0
      %v857 = vadd.f32 0.0, %v856
      %858 = vdwg.mxu0
      %s859 = scalar_lea.vmem [#allocation2], 64
      %v860 = vld [vmem:[%s859] sm:$0xff]
      %v861 = vld [vmem:[%s859 + $0x8] sm:$0xff]
      %v862 = vld [vmem:[%s859 + $0x10] sm:$0xff]
      %v863 = vld [vmem:[%s859 + $0x18] sm:$0xff]
      %v864 = vsel %vm460, %v850, -inf
      %865 = vmax.xlane.f32.xlu0 %v864
      %v866 = vpop.xlane.xlu0 %865
      %v867 = vsel %vm460, %v852, -inf
      %868 = vmax.xlane.f32.xlu0 %v867
      %v869 = vpop.xlane.xlu0 %868
      %v870 = vsel %vm460, %v855, -inf
      %871 = vmax.xlane.f32.xlu0 %v870
      %v872 = vpop.xlane.xlu0 %871
      %v873 = vsel %vm460, %v857, -inf
      %874 = vmax.xlane.f32.xlu0 %v873
      %v875 = vpop.xlane.xlu0 %874
      %v876 = vmax.f32 %v860, %v866
      %v877 = vmax.f32 %v861, %v869
      %v878 = vmax.f32 %v862, %v872
      %v879 = vmax.f32 %v863, %v875
      %v880 = vsub.f32 %v860, %v876
      %v881 = vsub.f32 %v861, %v877
      %v882 = vsub.f32 %v862, %v878
      %v883 = vsub.f32 %v863, %v879
      %v884 = vpow.pop %v880
      %v885 = vpow.pop %v881
      %v886 = vpow.pop %v882
      %v887 = vpow.pop %v883
      %889 = vset.pattern.permute.xlu0 0
      %890 = vperm.xlu0 %889, %v876
      %v891 = vpop.permute.xlu0 %890
      %894 = vset.pattern.permute.xlu0 0
      %895 = vperm.xlu0 %894, %v877
      %v896 = vpop.permute.xlu0 %895
      %899 = vset.pattern.permute.xlu0 0
      %900 = vperm.xlu0 %899, %v878
      %v901 = vpop.permute.xlu0 %900
      %904 = vset.pattern.permute.xlu0 0
      %905 = vperm.xlu0 %904, %v879
      %v906 = vpop.permute.xlu0 %905
      %v908 = vsub.f32 %v850, %v891
      %v909 = vsub.f32 %v852, %v896
      %v910 = vsub.f32 %v855, %v901
      %v911 = vsub.f32 %v857, %v906
      %v912 = vpow.pop %v908
      %v913 = vpow.pop %v909
      %v914 = vpow.pop %v910
      %v915 = vpow.pop %v911
      %s916 = scalar_lea.vmem [#allocation3], 64
      %v917 = vld [vmem:[%s916] sm:$0xff]
      %v918 = vld [vmem:[%s916 + $0x8] sm:$0xff]
      %v919 = vld [vmem:[%s916 + $0x10] sm:$0xff]
      %v920 = vld [vmem:[%s916 + $0x18] sm:$0xff]
      %v921 = vmul.f32 %v884, %v917
      %v922 = vmul.f32 %v885, %v918
      %v923 = vmul.f32 %v886, %v919
      %v924 = vmul.f32 %v887, %v920
      %v925 = vsel %vm460, %v912, 0.0
      %926 = vadd.xlane.f32.xlu0 %v925
      %v927 = vpop.xlane.xlu0 %926
      %v928 = vsel %vm460, %v913, 0.0
      %929 = vadd.xlane.f32.xlu0 %v928
      %v930 = vpop.xlane.xlu0 %929
      %v931 = vsel %vm460, %v914, 0.0
      %932 = vadd.xlane.f32.xlu0 %v931
      %v933 = vpop.xlane.xlu0 %932
      %v934 = vsel %vm460, %v915, 0.0
      %935 = vadd.xlane.f32.xlu0 %v934
      %v936 = vpop.xlane.xlu0 %935
      %v937 = vadd.f32 %v921, %v927
      %v938 = vadd.f32 %v922, %v930
      %v939 = vadd.f32 %v923, %v933
      %v940 = vadd.f32 %v924, %v936
      %941 = vst.msk [vmem:[%s916] sm:$0xff] %vm537, %v937
      %942 = vst.msk [vmem:[%s916 + $0x8] sm:$0xff] %vm537, %v938
      %943 = vst.msk [vmem:[%s916 + $0x10] sm:$0xff] %vm537, %v939
      %944 = vst.msk [vmem:[%s916 + $0x18] sm:$0xff] %vm537, %v940
      %s945 = scalar_lea.vmem [#allocation4], 64
      %v946 = vld [vmem:[%s945] sm:$0xff]
      %v947 = vld [vmem:[%s945 + $0x8] sm:$0xff]
      %v948 = vld [vmem:[%s945 + $0x10] sm:$0xff]
      %v949 = vld [vmem:[%s945 + $0x18] sm:$0xff]
      %951 = vset.pattern.permute.xlu0 0
      %952 = vperm.xlu0 %951, %v884
      %v953 = vpop.permute.xlu0 %952
      %956 = vset.pattern.permute.xlu0 0
      %957 = vperm.xlu0 %956, %v885
      %v958 = vpop.permute.xlu0 %957
      %961 = vset.pattern.permute.xlu0 0
      %962 = vperm.xlu0 %961, %v886
      %v963 = vpop.permute.xlu0 %962
      %966 = vset.pattern.permute.xlu0 0
      %967 = vperm.xlu0 %966, %v887
      %v968 = vpop.permute.xlu0 %967
      %v970 = vmul.f32 %v953, %v946
      %v971 = vmul.f32 %v958, %v947
      %v972 = vmul.f32 %v963, %v948
      %v973 = vmul.f32 %v968, %v949
      %v974 = vpack.c.bf16 %v913, %v912
      %v975 = vpack.c.bf16 %v915, %v914
      %976 = vrot.lane.b32.xlu0 %v580, 112
      %v977 = vpop.permute.xlu0 %976
      %978 = vrot.lane.b32.xlu0 %v581, 112
      %v979 = vpop.permute.xlu0 %978
      %v983 = vsel %vm460, %v974, 0
      %v986 = vsel %vm460, %v975, 0
      %988 = vmatpush.bf16.msra.mxu0 0
      %989 = vmatpush.bf16.msra.mxu0 0
      %990 = vmatpush.bf16.msra.mxu0 0
      %991 = vmatpush.bf16.msra.mxu0 0
      %992 = vmatpush.bf16.msra.mxu0 0
      %993 = vmatpush.bf16.msra.mxu0 0
      %994 = vmatpush.bf16.msra.mxu0 %v979
      %995 = vmatpush.bf16.msra.mxu0 %v977
      %996 = vmatmul.bf16.gmra.mxu0 %v983
      %v997 = vpop.f32.mrf.mxu0
      %v998 = vadd.f32 0.0, %v997
      %v999 = vpop.f32.mrf.mxu0
      %v1000 = vadd.f32 0.0, %v999
      %1001 = vmatmul.bf16.gmra.mxu0 %v986
      %v1002 = vpop.f32.mrf.mxu0
      %v1003 = vadd.f32 0.0, %v1002
      %v1004 = vpop.f32.mrf.mxu0
      %v1005 = vadd.f32 0.0, %v1004
      %1006 = vdwg.mxu0
      %v1007 = vadd.f32 %v970, %v998
      %v1008 = vadd.f32 %v971, %v1000
      %v1009 = vadd.f32 %v972, %v1003
      %v1010 = vadd.f32 %v973, %v1005
      %1011 = vst.msk [vmem:[%s945] sm:$0xff] %vm424, %v1007
      %1012 = vst.msk [vmem:[%s945 + $0x8] sm:$0xff] %vm424, %v1008
      %1013 = vst.msk [vmem:[%s945 + $0x10] sm:$0xff] %vm424, %v1009
      %1014 = vst.msk [vmem:[%s945 + $0x18] sm:$0xff] %vm424, %v1010
      %1015 = vst.msk [vmem:[%s859] sm:$0xff] %vm537, %v876
      %1016 = vst.msk [vmem:[%s859 + $0x8] sm:$0xff] %vm537, %v877
      %1017 = vst.msk [vmem:[%s859 + $0x10] sm:$0xff] %vm537, %v878
      %1018 = vst.msk [vmem:[%s859 + $0x18] sm:$0xff] %vm537, %v879
      %1019 = vrot.lane.b32.xlu0 %v412, 104
      %v1020 = vpop.permute.xlu0 %1019
      %1021 = vrot.lane.b32.xlu0 %v413, 104
      %v1022 = vpop.permute.xlu0 %1021
      %1023 = vrot.lane.b32.xlu0 %v422, 104
      %v1024 = vpop.permute.xlu0 %1023
      %1025 = vrot.lane.b32.xlu0 %v423, 104
      %v1026 = vpop.permute.xlu0 %1025
      %v1028 = vsel %vm424, %v1020, 0
      %v1031 = vsel %vm424, %v1022, 0
      %v1034 = vsel %vm424, %v1024, 0
      %v1037 = vsel %vm424, %v1026, 0
      %1039 = vmatpush.bf16.xpose.msra.mxu0 0
      %1040 = vmatpush.bf16.xpose.msra.mxu0 0
      %1041 = vmatpush.bf16.xpose.msra.mxu0 0
      %1042 = vmatpush.bf16.xpose.msra.mxu0 0
      %1043 = vmatpush.bf16.xpose.msra.mxu0 0
      %1044 = vmatpush.bf16.xpose.msra.mxu0 0
      %1045 = vmatpush.bf16.xpose.msra.mxu0 %v1037
      %1046 = vmatpush.bf16.xpose.msra.mxu0 %v1034
      %1047 = vmatmul.bf16.gmra.mxu0 %v1028
      %v1048 = vpop.f32.mrf.mxu0
      %v1049 = vadd.f32 0.0, %v1048
      %v1050 = vpop.f32.mrf.mxu0
      %v1051 = vadd.f32 0.0, %v1050
      %1052 = vmatmul.bf16.gmra.mxu0 %v1031
      %v1053 = vpop.f32.mrf.mxu0
      %v1054 = vadd.f32 0.0, %v1053
      %v1055 = vpop.f32.mrf.mxu0
      %v1056 = vadd.f32 0.0, %v1055
      %1057 = vdwg.mxu0
      %s1058 = scalar_lea.vmem [#allocation2], 96
      %v1059 = vld [vmem:[%s1058] sm:$0xff]
      %v1060 = vld [vmem:[%s1058 + $0x8] sm:$0xff]
      %v1061 = vld [vmem:[%s1058 + $0x10] sm:$0xff]
      %v1062 = vld [vmem:[%s1058 + $0x18] sm:$0xff]
      %v1063 = vsel %vm460, %v1049, -inf
      %1064 = vmax.xlane.f32.xlu0 %v1063
      %v1065 = vpop.xlane.xlu0 %1064
      %v1066 = vsel %vm460, %v1051, -inf
      %1067 = vmax.xlane.f32.xlu0 %v1066
      %v1068 = vpop.xlane.xlu0 %1067
      %v1069 = vsel %vm460, %v1054, -inf
      %1070 = vmax.xlane.f32.xlu0 %v1069
      %v1071 = vpop.xlane.xlu0 %1070
      %v1072 = vsel %vm460, %v1056, -inf
      %1073 = vmax.xlane.f32.xlu0 %v1072
      %v1074 = vpop.xlane.xlu0 %1073
      %v1075 = vmax.f32 %v1059, %v1065
      %v1076 = vmax.f32 %v1060, %v1068
      %v1077 = vmax.f32 %v1061, %v1071
      %v1078 = vmax.f32 %v1062, %v1074
      %v1079 = vsub.f32 %v1059, %v1075
      %v1080 = vsub.f32 %v1060, %v1076
      %v1081 = vsub.f32 %v1061, %v1077
      %v1082 = vsub.f32 %v1062, %v1078
      %v1083 = vpow.pop %v1079
      %v1084 = vpow.pop %v1080
      %v1085 = vpow.pop %v1081
      %v1086 = vpow.pop %v1082
      %1088 = vset.pattern.permute.xlu0 0
      %1089 = vperm.xlu0 %1088, %v1075
      %v1090 = vpop.permute.xlu0 %1089
      %1093 = vset.pattern.permute.xlu0 0
      %1094 = vperm.xlu0 %1093, %v1076
      %v1095 = vpop.permute.xlu0 %1094
      %1098 = vset.pattern.permute.xlu0 0
      %1099 = vperm.xlu0 %1098, %v1077
      %v1100 = vpop.permute.xlu0 %1099
      %1103 = vset.pattern.permute.xlu0 0
      %1104 = vperm.xlu0 %1103, %v1078
      %v1105 = vpop.permute.xlu0 %1104
      %v1107 = vsub.f32 %v1049, %v1090
      %v1108 = vsub.f32 %v1051, %v1095
      %v1109 = vsub.f32 %v1054, %v1100
      %v1110 = vsub.f32 %v1056, %v1105
      %v1111 = vpow.pop %v1107
      %v1112 = vpow.pop %v1108
      %v1113 = vpow.pop %v1109
      %v1114 = vpow.pop %v1110
      %s1115 = scalar_lea.vmem [#allocation3], 96
      %v1116 = vld [vmem:[%s1115] sm:$0xff]
      %v1117 = vld [vmem:[%s1115 + $0x8] sm:$0xff]
      %v1118 = vld [vmem:[%s1115 + $0x10] sm:$0xff]
      %v1119 = vld [vmem:[%s1115 + $0x18] sm:$0xff]
      %v1120 = vmul.f32 %v1083, %v1116
      %v1121 = vmul.f32 %v1084, %v1117
      %v1122 = vmul.f32 %v1085, %v1118
      %v1123 = vmul.f32 %v1086, %v1119
      %v1124 = vsel %vm460, %v1111, 0.0
      %1125 = vadd.xlane.f32.xlu0 %v1124
      %v1126 = vpop.xlane.xlu0 %1125
      %v1127 = vsel %vm460, %v1112, 0.0
      %1128 = vadd.xlane.f32.xlu0 %v1127
      %v1129 = vpop.xlane.xlu0 %1128
      %v1130 = vsel %vm460, %v1113, 0.0
      %1131 = vadd.xlane.f32.xlu0 %v1130
      %v1132 = vpop.xlane.xlu0 %1131
      %v1133 = vsel %vm460, %v1114, 0.0
      %1134 = vadd.xlane.f32.xlu0 %v1133
      %v1135 = vpop.xlane.xlu0 %1134
      %v1136 = vadd.f32 %v1120, %v1126
      %v1137 = vadd.f32 %v1121, %v1129
      %v1138 = vadd.f32 %v1122, %v1132
      %v1139 = vadd.f32 %v1123, %v1135
      %1140 = vst.msk [vmem:[%s1115] sm:$0xff] %vm537, %v1136
      %1141 = vst.msk [vmem:[%s1115 + $0x8] sm:$0xff] %vm537, %v1137
      %1142 = vst.msk [vmem:[%s1115 + $0x10] sm:$0xff] %vm537, %v1138
      %1143 = vst.msk [vmem:[%s1115 + $0x18] sm:$0xff] %vm537, %v1139
      %s1144 = scalar_lea.vmem [#allocation4], 96
      %v1145 = vld [vmem:[%s1144] sm:$0xff]
      %v1146 = vld [vmem:[%s1144 + $0x8] sm:$0xff]
      %v1147 = vld [vmem:[%s1144 + $0x10] sm:$0xff]
      %v1148 = vld [vmem:[%s1144 + $0x18] sm:$0xff]
      %1150 = vset.pattern.permute.xlu0 0
      %1151 = vperm.xlu0 %1150, %v1083
      %v1152 = vpop.permute.xlu0 %1151
      %1155 = vset.pattern.permute.xlu0 0
      %1156 = vperm.xlu0 %1155, %v1084
      %v1157 = vpop.permute.xlu0 %1156
      %1160 = vset.pattern.permute.xlu0 0
      %1161 = vperm.xlu0 %1160, %v1085
      %v1162 = vpop.permute.xlu0 %1161
      %1165 = vset.pattern.permute.xlu0 0
      %1166 = vperm.xlu0 %1165, %v1086
      %v1167 = vpop.permute.xlu0 %1166
      %v1169 = vmul.f32 %v1152, %v1145
      %v1170 = vmul.f32 %v1157, %v1146
      %v1171 = vmul.f32 %v1162, %v1147
      %v1172 = vmul.f32 %v1167, %v1148
      %v1173 = vpack.c.bf16 %v1112, %v1111
      %v1174 = vpack.c.bf16 %v1114, %v1113
      %1175 = vrot.lane.b32.xlu0 %v580, 104
      %v1176 = vpop.permute.xlu0 %1175
      %1177 = vrot.lane.b32.xlu0 %v581, 104
      %v1178 = vpop.permute.xlu0 %1177
      %v1182 = vsel %vm460, %v1173, 0
      %v1185 = vsel %vm460, %v1174, 0
      %1187 = vmatpush.bf16.msra.mxu0 0
      %1188 = vmatpush.bf16.msra.mxu0 0
      %1189 = vmatpush.bf16.msra.mxu0 0
      %1190 = vmatpush.bf16.msra.mxu0 0
      %1191 = vmatpush.bf16.msra.mxu0 0
      %1192 = vmatpush.bf16.msra.mxu0 0
      %1193 = vmatpush.bf16.msra.mxu0 %v1178
      %1194 = vmatpush.bf16.msra.mxu0 %v1176
      %1195 = vmatmul.bf16.gmra.mxu0 %v1182
      %v1196 = vpop.f32.mrf.mxu0
      %v1197 = vadd.f32 0.0, %v1196
      %v1198 = vpop.f32.mrf.mxu0
      %v1199 = vadd.f32 0.0, %v1198
      %1200 = vmatmul.bf16.gmra.mxu0 %v1185
      %v1201 = vpop.f32.mrf.mxu0
      %v1202 = vadd.f32 0.0, %v1201
      %v1203 = vpop.f32.mrf.mxu0
      %v1204 = vadd.f32 0.0, %v1203
      %1205 = vdwg.mxu0
      %v1206 = vadd.f32 %v1169, %v1197
      %v1207 = vadd.f32 %v1170, %v1199
      %v1208 = vadd.f32 %v1171, %v1202
      %v1209 = vadd.f32 %v1172, %v1204
      %1210 = vst.msk [vmem:[%s1144] sm:$0xff] %vm424, %v1206
      %1211 = vst.msk [vmem:[%s1144 + $0x8] sm:$0xff] %vm424, %v1207
      %1212 = vst.msk [vmem:[%s1144 + $0x10] sm:$0xff] %vm424, %v1208
      %1213 = vst.msk [vmem:[%s1144 + $0x18] sm:$0xff] %vm424, %v1209
      %1214 = vst.msk [vmem:[%s1058] sm:$0xff] %vm537, %v1075
      %1215 = vst.msk [vmem:[%s1058 + $0x8] sm:$0xff] %vm537, %v1076
      %1216 = vst.msk [vmem:[%s1058 + $0x10] sm:$0xff] %vm537, %v1077
      %1217 = vst.msk [vmem:[%s1058 + $0x18] sm:$0xff] %vm537, %v1078
      %p1218 = scmp.eq.s32.totalorder %s23, 1
      // Predicated region
      $region37: #{attention_forward.4} parent=31 // pred_check
        %p1219 = pneg %p1218
      $region38: #{attention_forward.4} parent=31 // pred_check_branch
        %1221 = sbr.rel (%p1219) target = $region40
      $region39: #{attention_forward.4} parent=31 // pred_region
        %v1222 = vld [vmem:[#allocation4] sm:$0xff]
        %v1223 = vld [vmem:[#allocation4 + $0x8] sm:$0xff]
        %v1224 = vld [vmem:[#allocation4 + $0x10] sm:$0xff]
        %v1225 = vld [vmem:[#allocation4 + $0x18] sm:$0xff]
        %v1226 = vld [vmem:[#allocation3] sm:$0xff]
        %v1227 = vld [vmem:[#allocation3 + $0x8] sm:$0xff]
        %v1228 = vld [vmem:[#allocation3 + $0x10] sm:$0xff]
        %v1229 = vld [vmem:[#allocation3 + $0x18] sm:$0xff]
        %v1230 = vrcp.pop %v1226
        %v1231 = vrcp.pop %v1227
        %v1232 = vrcp.pop %v1228
        %v1233 = vrcp.pop %v1229
        %1235 = vset.pattern.permute.xlu0 0
        %1236 = vperm.xlu0 %1235, %v1230
        %v1237 = vpop.permute.xlu0 %1236
        %1240 = vset.pattern.permute.xlu0 0
        %1241 = vperm.xlu0 %1240, %v1231
        %v1242 = vpop.permute.xlu0 %1241
        %1245 = vset.pattern.permute.xlu0 0
        %1246 = vperm.xlu0 %1245, %v1232
        %v1247 = vpop.permute.xlu0 %1246
        %1250 = vset.pattern.permute.xlu0 0
        %1251 = vperm.xlu0 %1250, %v1233
        %v1252 = vpop.permute.xlu0 %1251
        %v1254 = vmul.f32 %v1222, %v1237
        %v1255 = vmul.f32 %v1223, %v1242
        %v1256 = vmul.f32 %v1224, %v1247
        %v1257 = vmul.f32 %v1225, %v1252
        %v1258 = vld [vmem:[%s746] sm:$0xff]
        %v1259 = vld [vmem:[%s746 + $0x8] sm:$0xff]
        %v1260 = vld [vmem:[%s746 + $0x10] sm:$0xff]
        %v1261 = vld [vmem:[%s746 + $0x18] sm:$0xff]
        %v1262 = vld [vmem:[%s717] sm:$0xff]
        %v1263 = vld [vmem:[%s717 + $0x8] sm:$0xff]
        %v1264 = vld [vmem:[%s717 + $0x10] sm:$0xff]
        %v1265 = vld [vmem:[%s717 + $0x18] sm:$0xff]
        %v1266 = vrcp.pop %v1262
        %v1267 = vrcp.pop %v1263
        %v1268 = vrcp.pop %v1264
        %v1269 = vrcp.pop %v1265
        %1271 = vset.pattern.permute.xlu0 0
        %1272 = vperm.xlu0 %1271, %v1266
        %v1273 = vpop.permute.xlu0 %1272
        %1276 = vset.pattern.permute.xlu0 0
        %1277 = vperm.xlu0 %1276, %v1267
        %v1278 = vpop.permute.xlu0 %1277
        %1281 = vset.pattern.permute.xlu0 0
        %1282 = vperm.xlu0 %1281, %v1268
        %v1283 = vpop.permute.xlu0 %1282
        %1286 = vset.pattern.permute.xlu0 0
        %1287 = vperm.xlu0 %1286, %v1269
        %v1288 = vpop.permute.xlu0 %1287
        %v1290 = vmul.f32 %v1258, %v1273
        %v1291 = vmul.f32 %v1259, %v1278
        %v1292 = vmul.f32 %v1260, %v1283
        %v1293 = vmul.f32 %v1261, %v1288
        %v1294 = vld [vmem:[%s945] sm:$0xff]
        %v1295 = vld [vmem:[%s945 + $0x8] sm:$0xff]
        %v1296 = vld [vmem:[%s945 + $0x10] sm:$0xff]
        %v1297 = vld [vmem:[%s945 + $0x18] sm:$0xff]
        %v1298 = vld [vmem:[%s916] sm:$0xff]
        %v1299 = vld [vmem:[%s916 + $0x8] sm:$0xff]
        %v1300 = vld [vmem:[%s916 + $0x10] sm:$0xff]
        %v1301 = vld [vmem:[%s916 + $0x18] sm:$0xff]
        %v1302 = vrcp.pop %v1298
        %v1303 = vrcp.pop %v1299
        %v1304 = vrcp.pop %v1300
        %v1305 = vrcp.pop %v1301
        %1307 = vset.pattern.permute.xlu0 0
        %1308 = vperm.xlu0 %1307, %v1302
        %v1309 = vpop.permute.xlu0 %1308
        %1312 = vset.pattern.permute.xlu0 0
        %1313 = vperm.xlu0 %1312, %v1303
        %v1314 = vpop.permute.xlu0 %1313
        %1317 = vset.pattern.permute.xlu0 0
        %1318 = vperm.xlu0 %1317, %v1304
        %v1319 = vpop.permute.xlu0 %1318
        %1322 = vset.pattern.permute.xlu0 0
        %1323 = vperm.xlu0 %1322, %v1305
        %v1324 = vpop.permute.xlu0 %1323
        %v1326 = vmul.f32 %v1294, %v1309
        %v1327 = vmul.f32 %v1295, %v1314
        %v1328 = vmul.f32 %v1296, %v1319
        %v1329 = vmul.f32 %v1297, %v1324
        %v1330 = vld [vmem:[%s1144] sm:$0xff]
        %v1331 = vld [vmem:[%s1144 + $0x8] sm:$0xff]
        %v1332 = vld [vmem:[%s1144 + $0x10] sm:$0xff]
        %v1333 = vld [vmem:[%s1144 + $0x18] sm:$0xff]
        %v1334 = vld [vmem:[%s1115] sm:$0xff]
        %v1335 = vld [vmem:[%s1115 + $0x8] sm:$0xff]
        %v1336 = vld [vmem:[%s1115 + $0x10] sm:$0xff]
        %v1337 = vld [vmem:[%s1115 + $0x18] sm:$0xff]
        %v1338 = vrcp.pop %v1334
        %v1339 = vrcp.pop %v1335
        %v1340 = vrcp.pop %v1336
        %v1341 = vrcp.pop %v1337
        %1343 = vset.pattern.permute.xlu0 0
        %1344 = vperm.xlu0 %1343, %v1338
        %v1345 = vpop.permute.xlu0 %1344
        %1348 = vset.pattern.permute.xlu0 0
        %1349 = vperm.xlu0 %1348, %v1339
        %v1350 = vpop.permute.xlu0 %1349
        %1353 = vset.pattern.permute.xlu0 0
        %1354 = vperm.xlu0 %1353, %v1340
        %v1355 = vpop.permute.xlu0 %1354
        %1358 = vset.pattern.permute.xlu0 0
        %1359 = vperm.xlu0 %1358, %v1341
        %v1360 = vpop.permute.xlu0 %1359
        %v1362 = vmul.f32 %v1330, %v1345
        %v1363 = vmul.f32 %v1331, %v1350
        %v1364 = vmul.f32 %v1332, %v1355
        %v1365 = vmul.f32 %v1333, %v1360
        %1370 = vrot.lane.b32.xlu0 %v1290, 8
        %v1371 = vpop.permute.xlu0 %1370
        %1372 = vrot.lane.b32.xlu0 %v1291, 8
        %v1373 = vpop.permute.xlu0 %1372
        %1374 = vrot.lane.b32.xlu0 %v1292, 8
        %v1375 = vpop.permute.xlu0 %1374
        %1376 = vrot.lane.b32.xlu0 %v1293, 8
        %v1377 = vpop.permute.xlu0 %1376
        %1386 = vrot.lane.b32.xlu0 %v1326, 16
        %v1387 = vpop.permute.xlu0 %1386
        %1388 = vrot.lane.b32.xlu0 %v1327, 16
        %v1389 = vpop.permute.xlu0 %1388
        %1390 = vrot.lane.b32.xlu0 %v1328, 16
        %v1391 = vpop.permute.xlu0 %1390
        %1392 = vrot.lane.b32.xlu0 %v1329, 16
        %v1393 = vpop.permute.xlu0 %1392
        %1402 = vrot.lane.b32.xlu0 %v1362, 24
        %v1403 = vpop.permute.xlu0 %1402
        %1404 = vrot.lane.b32.xlu0 %v1363, 24
        %v1405 = vpop.permute.xlu0 %1404
        %1406 = vrot.lane.b32.xlu0 %v1364, 24
        %v1407 = vpop.permute.xlu0 %1406
        %1408 = vrot.lane.b32.xlu0 %v1365, 24
        %v1409 = vpop.permute.xlu0 %1408
        %v1414 = vsel %vm424, %v1254, %v1371
        %v1415 = vsel %vm424, %v1255, %v1373
        %v1416 = vsel %vm424, %v1256, %v1375
        %v1417 = vsel %vm424, %v1257, %v1377
        %vm1418 = vcmask 130048
        %v1419 = vsel %vm1418, %v1414, %v1387
        %v1420 = vsel %vm1418, %v1415, %v1389
        %v1421 = vsel %vm1418, %v1416, %v1391
        %v1422 = vsel %vm1418, %v1417, %v1393
        %vm1423 = vcmask 195584
        %v1424 = vsel %vm1423, %v1419, %v1403
        %v1425 = vsel %vm1423, %v1420, %v1405
        %v1426 = vsel %vm1423, %v1421, %v1407
        %v1427 = vsel %vm1423, %v1422, %v1409
        %v1428 = vpack.c.bf16 %v1424, %v1424
        %v1429 = vpack.c.bf16 %v1425, %v1425
        %v1430 = vpack.c.bf16 %v1426, %v1426
        %v1431 = vpack.c.bf16 %v1427, %v1427
        %vm1432 = vcmask 257024
        %1433 = vst.msk [vmem:[%s335] sm:$0xf] %vm1432, %v1428
        %1434 = vst.msk [vmem:[%s335 + $0x4] sm:$0xf] %vm1432, %v1429
        %1435 = vst.msk [vmem:[%s335 + $0x8] sm:$0xf] %vm1432, %v1430
        %1436 = vst.msk [vmem:[%s335 + $0xc] sm:$0xf] %vm1432, %v1431
      $region40: #{attention_forward.4} parent=31 // pred_fallthru
        _
      %s1437 = smul.u32 4, %s22
      %p1438 = scmp.lt.s32.totalorder %s20, 1
      %s1439 = scalar_select %p1438, %s20, 1
      %p1440 = scmp.lt.s32.totalorder %s1437, 7
      %s1441 = scalar_select %p1440, %s1437, 7
      %p1442 = scmp.lt.s32.totalorder %s21, 0
      %s1443 = scalar_select %p1442, %s21, 0
      %s1444 = sadd.s32 %s1443, %s1441
      %s1445 = smul.addr %s1439, 8
      %s1446 = sadd.s32 %s1444, %s1445
      %s1447 = smul.addr %s1446, 4
      %s1448 = scalar_lea.vmem %s3, %s1447
      // Predicated region
      $region41: #{attention_forward.4} parent=31 // pred_check
        %p1449 = pneg %p152
      $region42: #{attention_forward.4} parent=31 // pred_check_branch
        %1451 = sbr.rel (%p1449) target = $region44
      $region43: #{attention_forward.4} parent=31 // pred_region
        %s1452 = smul.u32 4, %s22
      $region44: #{attention_forward.4} parent=31 // pred_fallthru
        _
    $region32: #{attention_forward.4} parent=5 // pred_fallthru
      _
    %p1453 = scmp.le.s32.totalorder 2, %s9
    // Predicated region
    $region45: #{attention_forward.4} parent=5 // pred_check
      %p1454 = pneg %p1453
    $region46: #{attention_forward.4} parent=5 // pred_check_branch
      %1456 = sbr.rel (%p1454) target = $region48
    $region47: #{attention_forward.4} parent=5 // pred_region
      %s1457 = ssub.s32 %s9, 2
      // Predicated region
      $region49: #{attention_forward.4} parent=47 // pred_check
        %p1458 = pneg %p158
      $region50: #{attention_forward.4} parent=47 // pred_check_branch
        %1460 = sbr.rel (%p1458) target = $region52
      $region51: #{attention_forward.4} parent=47 // pred_region
        %s1461 = smul.u32 4, %s26
        %p1462 = scmp.lt.s32.totalorder %s24, 1
        %s1463 = scalar_select %p1462, %s24, 1
        %p1464 = scmp.lt.s32.totalorder %s1461, 7
        %s1465 = scalar_select %p1464, %s1461, 7
        %p1466 = scmp.lt.s32.totalorder %s25, 0
        %s1467 = scalar_select %p1466, %s25, 0
        %s1468 = sadd.s32 %s1467, %s1465
        %s1469 = smul.addr %s1463, 8
        %s1470 = sadd.s32 %s1468, %s1469
        %s1471 = smul.addr %s1470, 4
        %s1472 = scalar_lea.vmem %s3, %s1471
      $region52: #{attention_forward.4} parent=47 // pred_fallthru
        _
    $region48: #{attention_forward.4} parent=5 // pred_fallthru
      _
  $region6: #{attention_forward.4} parent=0 // loop_footer
    %s13 = sadd.s32 1, %s9
  $region7: #{attention_forward.4} parent=0 // loop_footer_branch
    %8 = sbr.rel target = $region3
  $region8: #{attention_forward.4} parent=0 // loop_exit
    _

</llo_original>
